<compile_context>
chip_gen: v7x
topology: tpu7x:2x2x1
jax: 0.10.0
libtpu: 0.0.40
codegen_flags: <defaults>
</compile_context>

<pallas_src>
import functools

import numpy as np

import jax
import jax.numpy as jnp
from jax.experimental import pallas as pl
from jax.experimental.pallas import tpu as pltpu


# ----------------------------- fused Pallas kernel ---------------------------

def _smaller_kernel(x_ref, w1_ref, b1_ref, w2_ref, b2_ref, wl_ref, bl_ref,
                    o_ref, pad2_ref, *, H, W, C1):
    """One image per grid step: conv1+ReLU -> conv2+ReLU -> global mean -> linear.

    Activations keep H on sublanes and (W, C) merged on lanes, so each conv is
    three lane-dense matmuls against a block-banded weight matrix (one per kh).

    x_ref   : (1, H+2, (W+2)*C0)  f32   pre-padded input, (W, C0) merged on lanes
    w1_ref  : (3, (W+2)*C0, W*C1) bf16  banded conv1 weights
    b1_ref  : (1, W*C1)           f32   conv1 bias tiled over w
    w2_ref  : (3, (W+2)*C1, W*C2) bf16  banded conv2 weights
    b2_ref  : (1, W*C2)           f32
    wl_ref  : (W*C2, NC)          f32   classifier with w-sum and 1/(H*W) folded in
    bl_ref  : (1, NC)             f32
    o_ref   : (1, 1, NC)          f32
    pad2_ref: (H+2, (W+2)*C1)     f32   VMEM scratch: zero-padded conv1 output
    """
    WC1 = W * C1
    WC2 = w2_ref.shape[2]

    # ---- conv1 + ReLU: 3 banded matmuls (bf16 operands, f32 accumulate) -----
    a1 = jnp.zeros((H, WC1), jnp.float32)
    for kh in range(3):
        a1 = a1 + jnp.dot(x_ref[0, kh:kh + H, :].astype(jnp.bfloat16),
                          w1_ref[kh], preferred_element_type=jnp.float32)
    a1 = jnp.maximum(a1 + b1_ref[...], 0.0)                     # (H, W*C1)

    # ---- stage conv1 output into the padded scratch: halo-only zeroing ------
    pad2_ref[0:1, :] = jnp.zeros((1, (W + 2) * C1), jnp.float32)
    pad2_ref[H + 1:H + 2, :] = jnp.zeros((1, (W + 2) * C1), jnp.float32)
    pad2_ref[:, 0:C1] = jnp.zeros((H + 2, C1), jnp.float32)
    pad2_ref[:, (W + 1) * C1:(W + 2) * C1] = jnp.zeros((H + 2, C1), jnp.float32)
    pad2_ref[1:H + 1, C1:(W + 1) * C1] = a1

    # ---- conv2 + ReLU --------------------------------------------------------
    a2 = jnp.zeros((H, WC2), jnp.float32)
    for kh in range(3):
        a2 = a2 + jnp.dot(pad2_ref[kh:kh + H, :].astype(jnp.bfloat16),
                          w2_ref[kh], preferred_element_type=jnp.float32)
    a2 = jnp.maximum(a2 + b2_ref[...], 0.0)                     # (H, W*C2)

    # ---- AdaptiveAvgPool2d((1,1)) + Flatten + Linear -------------------------
    # sum over h here; the sum over w and the 1/(H*W) factor are folded into wl.
    rowsum = jnp.sum(a2, axis=0, keepdims=True)                 # (1, W*C2)
    o_ref[0] = jnp.dot(rowsum, wl_ref[...],
                       preferred_element_type=jnp.float32) + bl_ref[...]


# ------------------------- host-side weight repacking -------------------------

def prepare_weights(params, H, W):
    """One-time repack of the PyTorch-style weights into banded-matmul form.

    For each conv and each kh in {0,1,2} builds B[kh] of shape
    ((W+2)*Cin, W*Cout) with
        B[kh][(w+kw)*Cin + cin, w*Cout + cout] = W_hwio[kh, kw, cin, cout],
    so conv(x)[h, :] = sum_kh  xpad_merged[h+kh, :] @ B[kh].
    Biases are tiled over w; pooling (w-sum and 1/(H*W)) is folded into the
    classifier matrix.
    """
    w1 = np.asarray(params["w1"], np.float32)          # (3,3,C0,C1) HWIO
    w2 = np.asarray(params["w2"], np.float32)          # (3,3,C1,C2) HWIO
    b1 = np.asarray(params["b1"], np.float32)
    b2 = np.asarray(params["b2"], np.float32)
    wl = np.asarray(params["wl"], np.float32)          # (NC, C2) torch Linear layout
    bl = np.asarray(params["bl"], np.float32)
    C0, C1 = w1.shape[2], w1.shape[3]
    C2 = w2.shape[3]

    def banded(w_hwio, cin, cout):
        B = np.zeros((3, (W + 2) * cin, W * cout), np.float32)
        for kh in range(3):
            for kw in range(3):
                blk = w_hwio[kh, kw]                    # (cin, cout)
                for w_ in range(W):
                    B[kh, (w_ + kw) * cin:(w_ + kw + 1) * cin,
                      w_ * cout:(w_ + 1) * cout] = blk
        return B

    return {
        "B1": jnp.asarray(banded(w1, C0, C1), jnp.bfloat16),
        "b1t": jnp.asarray(np.tile(b1, W)[None, :], jnp.float32),
        "B2": jnp.asarray(banded(w2, C1, C2), jnp.bfloat16),
        "b2t": jnp.asarray(np.tile(b2, W)[None, :], jnp.float32),
        "wlp": jnp.asarray(np.tile(wl.T / float(H * W), (W, 1)), jnp.float32),
        "bl": jnp.asarray(bl[None, :], jnp.float32),
    }


# ------------------------------- wrapper --------------------------------------

def smaller_forward_pallas(x_nchw, kp):
    """NCHW input -> (N, 10) logits; single fused pallas_call, batch-parallel grid."""
    N, C0, H, W = x_nchw.shape
    C1 = kp["B1"].shape[2] // W
    C2 = kp["B2"].shape[2] // W
    NC = kp["wlp"].shape[1]

    # Pre-pad the tiny input in the wrapper; merge (W+2, C0) into the lane dim.
    x = jnp.transpose(x_nchw, (0, 2, 3, 1)).astype(jnp.float32)       # NHWC
    xp = jnp.pad(x, ((0, 0), (1, 1), (1, 1), (0, 0)))
    xp = xp.reshape(N, H + 2, (W + 2) * C0)

    kernel = functools.partial(_smaller_kernel, H=H, W=W, C1=C1)
    out = pl.pallas_call(
        kernel,
        out_shape=jax.ShapeDtypeStruct((N, 1, NC), jnp.float32),
        grid=(N,),
        in_specs=[
            pl.BlockSpec((1, H + 2, (W + 2) * C0), lambda n: (n, 0, 0)),
            pl.BlockSpec((3, (W + 2) * C0, W * C1), lambda n: (0, 0, 0)),
            pl.BlockSpec((1, W * C1), lambda n: (0, 0)),
            pl.BlockSpec((3, (W + 2) * C1, W * C2), lambda n: (0, 0, 0)),
            pl.BlockSpec((1, W * C2), lambda n: (0, 0)),
            pl.BlockSpec((W * C2, NC), lambda n: (0, 0)),
            pl.BlockSpec((1, NC), lambda n: (0, 0)),
        ],
        out_specs=pl.BlockSpec((1, 1, NC), lambda n: (n, 0, 0)),
        scratch_shapes=[pltpu.VMEM((H + 2, (W + 2) * C1), jnp.float32)],
        compiler_params=pltpu.CompilerParams(
            dimension_semantics=("parallel",),
            vmem_limit_bytes=32 * 1024 * 1024),
    )(xp, kp["B1"], kp["b1t"], kp["B2"], kp["b2t"], kp["wlp"], kp["bl"])
    return out.reshape(N, NC)


smaller_forward = jax.jit(smaller_forward_pallas)


# --------------------------- params & reference -------------------------------

def init_params(key):
    c1_in, c1_out = 3, 16
    c2_in, c2_out = 16, 32
    num_classes = 10
    k = jax.random.split(key, 4)
    return {
        # conv weights stored HWIO (3,3,Cin,Cout)
        "w1": jax.random.normal(k[0], (3, 3, c1_in, c1_out), jnp.float32)
              * (2.0 / (9 * c1_in)) ** 0.5,
        "b1": jnp.zeros((c1_out,), jnp.float32),
        "w2": jax.random.normal(k[1], (3, 3, c2_in, c2_out), jnp.float32)
              * (2.0 / (9 * c2_in)) ** 0.5,
        "b2": jnp.zeros((c2_out,), jnp.float32),
        # nn.Linear weight is (out_features, in_features) = (10, 32)
        "wl": jax.random.normal(k[2], (num_classes, c2_out), jnp.float32)
              * (1.0 / c2_out) ** 0.5,
        "bl": jax.random.normal(k[3], (num_classes,), jnp.float32) * 0.01,
    }


def reference_forward(x_nchw, params):
    """Pure-JAX f32 reference (XLA conv) used only for a correctness check."""
    def conv(x, w_hwio, b):
        w_oihw = jnp.transpose(w_hwio, (3, 2, 0, 1))
        y = jax.lax.conv_general_dilated(
            x, w_oihw, window_strides=(1, 1), padding="SAME",
            dimension_numbers=("NCHW", "OIHW", "NCHW"))
        return jax.nn.relu(y + b[None, :, None, None])

    y = conv(x_nchw.astype(jnp.float32), params["w1"], params["b1"])
    y = conv(y, params["w2"], params["b2"])
    pooled = jnp.mean(y, axis=(2, 3))                 # AdaptiveAvgPool2d + Flatten
    return pooled @ params["wl"].T + params["bl"]


if __name__ == "__main__":
    key = jax.random.PRNGKey(0)
    k_param, k_x = jax.random.split(key)
    params = init_params(k_param)

    # Small CIFAR-like input: batch=2, channels=3, spatial=16x16, NCHW.
    x = jax.random.normal(k_x, (2, 3, 16, 16), jnp.float32)

    kparams = prepare_weights(params, H=16, W=16)
    out = smaller_forward(x, kparams)
    out = jax.block_until_ready(out)
    assert out.shape == (2, 10) and out.dtype == jnp.float32

    ref = reference_forward(x, params)
    # bf16 matmul operands (f32 accumulate) vs the f32 XLA reference.
    err = float(jnp.max(jnp.abs(out - ref)))
    assert jnp.allclose(out, ref, atol=2e-2, rtol=2e-2), f"mismatch vs reference: {err}"

    print("KERNEL_OK")
</pallas_src>

<mosaic_0001>
module attributes {stable_mosaic.version = 11 : i64} {
  func.func @_smaller_kernel(%arg0: i32, %arg1: memref<1x18x54xf32, #tpu.memory_space<vmem>>, %arg2: memref<3x54x256xbf16, #tpu.memory_space<vmem>>, %arg3: memref<1x256xf32, #tpu.memory_space<vmem>>, %arg4: memref<3x288x512xbf16, #tpu.memory_space<vmem>>, %arg5: memref<1x512xf32, #tpu.memory_space<vmem>>, %arg6: memref<512x10xf32, #tpu.memory_space<vmem>>, %arg7: memref<1x10xf32, #tpu.memory_space<vmem>>, %arg8: memref<1x1x10xf32, #tpu.memory_space<vmem>>, %arg9: memref<18x288xf32, #tpu.memory_space<vmem>>) attributes {dimension_semantics = [#tpu.dimension_semantics<parallel>], iteration_bounds = array<i64: 2>, scalar_prefetch = 0 : i64, scratch_operands = 1 : i64, tpu.core_type = #tpu.core_type<tc>, window_params = [{transform_indices = @transform_0, window_bounds = array<i64: 1, 18, 54>}, {pipeline_mode = #tpu.pipeline_mode<synchronous>, transform_indices = @transform_1, window_bounds = array<i64: 3, 54, 256>}, {pipeline_mode = #tpu.pipeline_mode<synchronous>, transform_indices = @transform_2, window_bounds = array<i64: 1, 256>}, {pipeline_mode = #tpu.pipeline_mode<synchronous>, transform_indices = @transform_3, window_bounds = array<i64: 3, 288, 512>}, {pipeline_mode = #tpu.pipeline_mode<synchronous>, transform_indices = @transform_4, window_bounds = array<i64: 1, 512>}, {pipeline_mode = #tpu.pipeline_mode<synchronous>, transform_indices = @transform_5, window_bounds = array<i64: 512, 10>}, {pipeline_mode = #tpu.pipeline_mode<synchronous>, transform_indices = @transform_6, window_bounds = array<i64: 1, 10>}, {transform_indices = @transform_7, window_bounds = array<i64: 1, 1, 10>}]} {
    %cst = arith.constant 0.000000e+00 : f32
    %0 = vector.broadcast %cst : f32 to vector<16x256xf32>
    %c0 = arith.constant 0 : index
    %c0_0 = arith.constant 0 : index
    %c0_1 = arith.constant 0 : index
    %1 = vector.load %arg1[%c0, %c0_0, %c0_1] : memref<1x18x54xf32, #tpu.memory_space<vmem>>, vector<1x16x54xf32>
    %2 = vector.shape_cast %1 : vector<1x16x54xf32> to vector<16x54xf32>
    %3 = arith.truncf %2 : vector<16x54xf32> to vector<16x54xbf16>
    %c0_2 = arith.constant 0 : index
    %c0_3 = arith.constant 0 : index
    %c0_4 = arith.constant 0 : index
    %4 = vector.load %arg2[%c0_2, %c0_3, %c0_4] : memref<3x54x256xbf16, #tpu.memory_space<vmem>>, vector<1x54x256xbf16>
    %5 = vector.shape_cast %4 : vector<1x54x256xbf16> to vector<54x256xbf16>
    %cst_5 = arith.constant dense<0.000000e+00> : vector<16x256xf32>
    %6 = tpu.matmul %3, %5, %cst_5 {dimension_numbers = #tpu.dot_dimension_numbers<[1], [0], [0], [1], [0, 0, 1, 1], [], []>} : vector<16x54xbf16>, vector<54x256xbf16>, vector<16x256xf32> -> vector<16x256xf32>
    %7 = arith.addf %0, %6 : vector<16x256xf32>
    %c0_6 = arith.constant 0 : index
    %c1 = arith.constant 1 : index
    %c0_7 = arith.constant 0 : index
    %8 = vector.load %arg1[%c0_6, %c1, %c0_7] : memref<1x18x54xf32, #tpu.memory_space<vmem>>, vector<1x16x54xf32>
    %9 = vector.shape_cast %8 : vector<1x16x54xf32> to vector<16x54xf32>
    %10 = arith.truncf %9 : vector<16x54xf32> to vector<16x54xbf16>
    %c1_8 = arith.constant 1 : index
    %c0_9 = arith.constant 0 : index
    %c0_10 = arith.constant 0 : index
    %11 = vector.load %arg2[%c1_8, %c0_9, %c0_10] : memref<3x54x256xbf16, #tpu.memory_space<vmem>>, vector<1x54x256xbf16>
    %12 = vector.shape_cast %11 : vector<1x54x256xbf16> to vector<54x256xbf16>
    %cst_11 = arith.constant dense<0.000000e+00> : vector<16x256xf32>
    %13 = tpu.matmul %10, %12, %cst_11 {dimension_numbers = #tpu.dot_dimension_numbers<[1], [0], [0], [1], [0, 0, 1, 1], [], []>} : vector<16x54xbf16>, vector<54x256xbf16>, vector<16x256xf32> -> vector<16x256xf32>
    %14 = arith.addf %7, %13 : vector<16x256xf32>
    %c0_12 = arith.constant 0 : index
    %c2 = arith.constant 2 : index
    %c0_13 = arith.constant 0 : index
    %15 = vector.load %arg1[%c0_12, %c2, %c0_13] : memref<1x18x54xf32, #tpu.memory_space<vmem>>, vector<1x16x54xf32>
    %16 = vector.shape_cast %15 : vector<1x16x54xf32> to vector<16x54xf32>
    %17 = arith.truncf %16 : vector<16x54xf32> to vector<16x54xbf16>
    %c2_14 = arith.constant 2 : index
    %c0_15 = arith.constant 0 : index
    %c0_16 = arith.constant 0 : index
    %18 = vector.load %arg2[%c2_14, %c0_15, %c0_16] : memref<3x54x256xbf16, #tpu.memory_space<vmem>>, vector<1x54x256xbf16>
    %19 = vector.shape_cast %18 : vector<1x54x256xbf16> to vector<54x256xbf16>
    %cst_17 = arith.constant dense<0.000000e+00> : vector<16x256xf32>
    %20 = tpu.matmul %17, %19, %cst_17 {dimension_numbers = #tpu.dot_dimension_numbers<[1], [0], [0], [1], [0, 0, 1, 1], [], []>} : vector<16x54xbf16>, vector<54x256xbf16>, vector<16x256xf32> -> vector<16x256xf32>
    %21 = arith.addf %14, %20 : vector<16x256xf32>
    %c0_18 = arith.constant 0 : index
    %c0_19 = arith.constant 0 : index
    %22 = vector.load %arg3[%c0_18, %c0_19] : memref<1x256xf32, #tpu.memory_space<vmem>>, vector<1x256xf32>
    %23 = vector.broadcast %22 : vector<1x256xf32> to vector<16x256xf32>
    %24 = arith.addf %21, %23 : vector<16x256xf32>
    %cst_20 = arith.constant 0.000000e+00 : f32
    %25 = vector.broadcast %cst_20 : f32 to vector<16x256xf32>
    %26 = arith.maximumf %24, %25 : vector<16x256xf32>
    %cst_21 = arith.constant 0.000000e+00 : f32
    %27 = vector.broadcast %cst_21 : f32 to vector<1x288xf32>
    %c0_22 = arith.constant 0 : index
    %c0_23 = arith.constant 0 : index
    %28 = vector.load %arg9[%c0_22, %c0_23] : memref<18x288xf32, #tpu.memory_space<vmem>>, vector<1x288xf32>
    tpu.vector_store %arg9[%c0_22, %c0_23], %27 {strides = array<i32>} : memref<18x288xf32, #tpu.memory_space<vmem>>, vector<1x288xf32>,
    %cst_24 = arith.constant 0.000000e+00 : f32
    %29 = vector.broadcast %cst_24 : f32 to vector<1x288xf32>
    %c17 = arith.constant 17 : index
    %c0_25 = arith.constant 0 : index
    %30 = vector.load %arg9[%c17, %c0_25] : memref<18x288xf32, #tpu.memory_space<vmem>>, vector<1x288xf32>
    tpu.vector_store %arg9[%c17, %c0_25], %29 {strides = array<i32>} : memref<18x288xf32, #tpu.memory_space<vmem>>, vector<1x288xf32>,
    %cst_26 = arith.constant 0.000000e+00 : f32
    %31 = vector.broadcast %cst_26 : f32 to vector<18x16xf32>
    %c0_27 = arith.constant 0 : index
    %c0_28 = arith.constant 0 : index
    %32 = vector.load %arg9[%c0_27, %c0_28] : memref<18x288xf32, #tpu.memory_space<vmem>>, vector<18x16xf32>
    tpu.vector_store %arg9[%c0_27, %c0_28], %31 {strides = array<i32>} : memref<18x288xf32, #tpu.memory_space<vmem>>, vector<18x16xf32>,
    %cst_29 = arith.constant 0.000000e+00 : f32
    %33 = vector.broadcast %cst_29 : f32 to vector<18x16xf32>
    %c0_30 = arith.constant 0 : index
    %c272 = arith.constant 272 : index
    %34 = vector.load %arg9[%c0_30, %c272] : memref<18x288xf32, #tpu.memory_space<vmem>>, vector<18x16xf32>
    tpu.vector_store %arg9[%c0_30, %c272], %33 {strides = array<i32>} : memref<18x288xf32, #tpu.memory_space<vmem>>, vector<18x16xf32>,
    %c1_31 = arith.constant 1 : index
    %c16 = arith.constant 16 : index
    %35 = vector.load %arg9[%c1_31, %c16] : memref<18x288xf32, #tpu.memory_space<vmem>>, vector<16x256xf32>
    tpu.vector_store %arg9[%c1_31, %c16], %26 {strides = array<i32>} : memref<18x288xf32, #tpu.memory_space<vmem>>, vector<16x256xf32>,
    %cst_32 = arith.constant 0.000000e+00 : f32
    %36 = vector.broadcast %cst_32 : f32 to vector<16x512xf32>
    %c0_33 = arith.constant 0 : index
    %c0_34 = arith.constant 0 : index
    %37 = vector.load %arg9[%c0_33, %c0_34] : memref<18x288xf32, #tpu.memory_space<vmem>>, vector<16x288xf32>
    %38 = arith.truncf %37 : vector<16x288xf32> to vector<16x288xbf16>
    %c0_35 = arith.constant 0 : index
    %c0_36 = arith.constant 0 : index
    %c0_37 = arith.constant 0 : index
    %39 = vector.load %arg4[%c0_35, %c0_36, %c0_37] : memref<3x288x512xbf16, #tpu.memory_space<vmem>>, vector<1x288x512xbf16>
    %40 = vector.shape_cast %39 : vector<1x288x512xbf16> to vector<288x512xbf16>
    %cst_38 = arith.constant dense<0.000000e+00> : vector<16x512xf32>
    %41 = tpu.matmul %38, %40, %cst_38 {dimension_numbers = #tpu.dot_dimension_numbers<[1], [0], [0], [1], [0, 0, 1, 1], [], []>} : vector<16x288xbf16>, vector<288x512xbf16>, vector<16x512xf32> -> vector<16x512xf32>
    %42 = arith.addf %36, %41 : vector<16x512xf32>
    %c1_39 = arith.constant 1 : index
    %c0_40 = arith.constant 0 : index
    %43 = vector.load %arg9[%c1_39, %c0_40] : memref<18x288xf32, #tpu.memory_space<vmem>>, vector<16x288xf32>
    %44 = arith.truncf %43 : vector<16x288xf32> to vector<16x288xbf16>
    %c1_41 = arith.constant 1 : index
    %c0_42 = arith.constant 0 : index
    %c0_43 = arith.constant 0 : index
    %45 = vector.load %arg4[%c1_41, %c0_42, %c0_43] : memref<3x288x512xbf16, #tpu.memory_space<vmem>>, vector<1x288x512xbf16>
    %46 = vector.shape_cast %45 : vector<1x288x512xbf16> to vector<288x512xbf16>
    %cst_44 = arith.constant dense<0.000000e+00> : vector<16x512xf32>
    %47 = tpu.matmul %44, %46, %cst_44 {dimension_numbers = #tpu.dot_dimension_numbers<[1], [0], [0], [1], [0, 0, 1, 1], [], []>} : vector<16x288xbf16>, vector<288x512xbf16>, vector<16x512xf32> -> vector<16x512xf32>
    %48 = arith.addf %42, %47 : vector<16x512xf32>
    %c2_45 = arith.constant 2 : index
    %c0_46 = arith.constant 0 : index
    %49 = vector.load %arg9[%c2_45, %c0_46] : memref<18x288xf32, #tpu.memory_space<vmem>>, vector<16x288xf32>
    %50 = arith.truncf %49 : vector<16x288xf32> to vector<16x288xbf16>
    %c2_47 = arith.constant 2 : index
    %c0_48 = arith.constant 0 : index
    %c0_49 = arith.constant 0 : index
    %51 = vector.load %arg4[%c2_47, %c0_48, %c0_49] : memref<3x288x512xbf16, #tpu.memory_space<vmem>>, vector<1x288x512xbf16>
    %52 = vector.shape_cast %51 : vector<1x288x512xbf16> to vector<288x512xbf16>
    %cst_50 = arith.constant dense<0.000000e+00> : vector<16x512xf32>
    %53 = tpu.matmul %50, %52, %cst_50 {dimension_numbers = #tpu.dot_dimension_numbers<[1], [0], [0], [1], [0, 0, 1, 1], [], []>} : vector<16x288xbf16>, vector<288x512xbf16>, vector<16x512xf32> -> vector<16x512xf32>
    %54 = arith.addf %48, %53 : vector<16x512xf32>
    %c0_51 = arith.constant 0 : index
    %c0_52 = arith.constant 0 : index
    %55 = vector.load %arg5[%c0_51, %c0_52] : memref<1x512xf32, #tpu.memory_space<vmem>>, vector<1x512xf32>
    %56 = vector.broadcast %55 : vector<1x512xf32> to vector<16x512xf32>
    %57 = arith.addf %54, %56 : vector<16x512xf32>
    %cst_53 = arith.constant 0.000000e+00 : f32
    %58 = vector.broadcast %cst_53 : f32 to vector<16x512xf32>
    %59 = arith.maximumf %57, %58 : vector<16x512xf32>
    %cst_54 = arith.constant dense<0.000000e+00> : vector<512xf32>
    %60 = vector.multi_reduction <add>, %59, %cst_54 [0] : vector<16x512xf32> to vector<512xf32>
    %61 = vector.shape_cast %60 : vector<512xf32> to vector<1x512xf32>
    %c0_55 = arith.constant 0 : index
    %c0_56 = arith.constant 0 : index
    %62 = vector.load %arg6[%c0_55, %c0_56] : memref<512x10xf32, #tpu.memory_space<vmem>>, vector<512x10xf32>
    %cst_57 = arith.constant dense<0.000000e+00> : vector<1x10xf32>
    %63 = tpu.matmul %61, %62, %cst_57 {dimension_numbers = #tpu.dot_dimension_numbers<[1], [0], [0], [1], [0, 0, 1, 1], [], []>} : vector<1x512xf32>, vector<512x10xf32>, vector<1x10xf32> -> vector<1x10xf32>
    %c0_58 = arith.constant 0 : index
    %c0_59 = arith.constant 0 : index
    %64 = vector.load %arg7[%c0_58, %c0_59] : memref<1x10xf32, #tpu.memory_space<vmem>>, vector<1x10xf32>
    %65 = arith.addf %63, %64 : vector<1x10xf32>
    %c0_60 = arith.constant 0 : index
    %c0_61 = arith.constant 0 : index
    %c0_62 = arith.constant 0 : index
    %66 = vector.load %arg8[%c0_60, %c0_61, %c0_62] : memref<1x1x10xf32, #tpu.memory_space<vmem>>, vector<1x1x10xf32>
    %67 = vector.shape_cast %66 : vector<1x1x10xf32> to vector<1x10xf32>
    %68 = vector.shape_cast %65 : vector<1x10xf32> to vector<1x1x10xf32>
    tpu.vector_store %arg8[%c0_60, %c0_61, %c0_62], %68 {strides = array<i32>} : memref<1x1x10xf32, #tpu.memory_space<vmem>>, vector<1x1x10xf32>,
    return
  }
  func.func @transform_0(%arg0: i32) -> (i32, i32, i32) {
    %c0_i32 = arith.constant 0 : i32
    %c0_i32_0 = arith.constant 0 : i32
    %c0_i32_1 = arith.constant 0 : i32
    return %arg0, %c0_i32, %c0_i32_0 : i32, i32, i32
  }
  func.func @transform_1(%arg0: i32) -> (i32, i32, i32) {
    %c0_i32 = arith.constant 0 : i32
    %c0_i32_0 = arith.constant 0 : i32
    %c0_i32_1 = arith.constant 0 : i32
    %c0_i32_2 = arith.constant 0 : i32
    return %c0_i32, %c0_i32_0, %c0_i32_1 : i32, i32, i32
  }
  func.func @transform_2(%arg0: i32) -> (i32, i32) {
    %c0_i32 = arith.constant 0 : i32
    %c0_i32_0 = arith.constant 0 : i32
    %c0_i32_1 = arith.constant 0 : i32
    return %c0_i32, %c0_i32_0 : i32, i32
  }
  func.func @transform_3(%arg0: i32) -> (i32, i32, i32) {
    %c0_i32 = arith.constant 0 : i32
    %c0_i32_0 = arith.constant 0 : i32
    %c0_i32_1 = arith.constant 0 : i32
    %c0_i32_2 = arith.constant 0 : i32
    return %c0_i32, %c0_i32_0, %c0_i32_1 : i32, i32, i32
  }
  func.func @transform_4(%arg0: i32) -> (i32, i32) {
    %c0_i32 = arith.constant 0 : i32
    %c0_i32_0 = arith.constant 0 : i32
    %c0_i32_1 = arith.constant 0 : i32
    return %c0_i32, %c0_i32_0 : i32, i32
  }
  func.func @transform_5(%arg0: i32) -> (i32, i32) {
    %c0_i32 = arith.constant 0 : i32
    %c0_i32_0 = arith.constant 0 : i32
    %c0_i32_1 = arith.constant 0 : i32
    return %c0_i32, %c0_i32_0 : i32, i32
  }
  func.func @transform_6(%arg0: i32) -> (i32, i32) {
    %c0_i32 = arith.constant 0 : i32
    %c0_i32_0 = arith.constant 0 : i32
    %c0_i32_1 = arith.constant 0 : i32
    return %c0_i32, %c0_i32_0 : i32, i32
  }
  func.func @transform_7(%arg0: i32) -> (i32, i32, i32) {
    %c0_i32 = arith.constant 0 : i32
    %c0_i32_0 = arith.constant 0 : i32
    %c0_i32_1 = arith.constant 0 : i32
    return %arg0, %c0_i32, %c0_i32_0 : i32, i32, i32
  }
}

</mosaic_0001>

<llo_original>
// kernel: smaller_forward_pallas.1
$region0: #{smaller_forward_pallas.1}
  #allocation0 [shape = 'u32[]', space=smem, size = 0x4, offset = 0x4, fixed_abs, tag = 'smem constant byte address 0x4 - core index']
  #allocation1 [shape = 'u32[144,128]{1,0:T(1,128)}', space=vmem, size = 0x12000, scoped, tag = 'internal scratch']
  #allocation2 [shape = 'f32[18,288]{1,0:T(8,128)}', space=vmem, size = 0x9000, scoped, tag = 'scratch operand']
  %s0 = inlined_call_operand.vmem [shape: f32[2,18,54], index: 0, kind: input, shape index: {}]
  %s1 = inlined_call_operand.vmem [shape: bf16[3,54,256], index: 1, kind: input, shape index: {}]
  %s2 = inlined_call_operand.vmem [shape: f32[1,256], index: 2, kind: input, shape index: {}]
  %s3 = inlined_call_operand.hbm [shape: bf16[3,288,512], index: 3, kind: input, shape index: {}]
  %s4 = inlined_call_operand.vmem [shape: f32[1,512], index: 4, kind: input, shape index: {}]
  %s5 = inlined_call_operand.vmem [shape: f32[512,10], index: 5, kind: input, shape index: {}]
  %s6 = inlined_call_operand.vmem [shape: f32[1,10], index: 6, kind: input, shape index: {}]
  %s7 = inlined_call_operand.hbm [shape: f32[2,1,10], index: 7, kind: output, shape index: {}]
  %s8 = sld [smem:[#allocation0]]
  $region65: #{smaller_forward_pallas.1} parent=0
    _
  %s10 = ssub.s32 1, %s8
  %s11 = scalar_select 0, %s10, %s8
  $region1: #{smaller_forward_pallas.1} parent=0
    #allocation3 [shape = 'u8[884736]{0}', space=vmem, size = 0xd8000, scoped, tag = 'input window, operand 3, single buffered']
    #allocation4 [shape = 's32[2]{0}', space=sflag, size = 0x8, scoped, tag = 'scoped memory for smaller_forward_pallas.1']
    #allocation5 [shape = 's32[2]{0}', space=sflag, size = 0x8, scoped, tag = 'scoped memory for smaller_forward_pallas.1']
    #allocation6 [shape = 'u8[1024]{0}', space=vmem, size = 0x400, scoped, tag = 'output window, operand 0']
    %12 = vsyncpa [#allocation4], 0
    %13 = vsyncpa [#allocation5], 0
    %s14 = scalar_lea.sflag [#allocation5], 1
    %15 = vsyncpa %s14, 0
    loop: start=0, step=1, limit=4
    $region2: #{smaller_forward_pallas.1} parent=1 // loop_pre_header
      _
    $region3: #{smaller_forward_pallas.1} parent=1 // loop_header
      %s17 = sphi 0, %s21
      %p18 = scmp.ge.s32.totalorder %s17, 4
      %s27 = sphi 0, %s29
      %s30 = sphi 0, %s27
      %s31 = sphi 0, %s30
      %s47 = sphi 0, %s31
      %s51 = sphi 0, %s51
      %s53 = sphi 0, %s51
      %s54 = sphi 0, %s53
      %s68 = sphi 0, %s54
      %s72 = sphi 0, %s72
      %s74 = sphi 0, %s72
      %s75 = sphi 0, %s74
      %s89 = sphi 0, %s75
      %s93 = sphi 0, %s93
      %s95 = sphi 0, %s93
      %s96 = sphi 0, %s95
      %s110 = sphi 0, %s96
      %s114 = sphi 0, %s114
      %s116 = sphi 0, %s114
      %s117 = sphi 0, %s116
      %s131 = sphi 0, %s117
      %s135 = sphi 0, %s135
      %s137 = sphi 0, %s135
      %s138 = sphi 0, %s137
      %s152 = sphi 0, %s138
      %s156 = sphi 0, %s156
      %s158 = sphi 0, %s156
      %s159 = sphi 0, %s158
      %s173 = sphi 0, %s159
      %s179 = sphi 0, %s181
      %s182 = sphi 0, %s179
      %s183 = sphi 0, %s182
      %s199 = sphi 0, %s183
    $region4: #{smaller_forward_pallas.1} parent=1 // loop_header_branch
      %20 = sbr.rel (%p18) target = $region8
    $region5: #{smaller_forward_pallas.1} parent=1 // loop_body
      %s22 = ssub.s32 %s17, 1
      %s23 = ssub.s32 %s17, 2
      %s24 = sadd.s32 %s17, 1
      %s25 = ssub.s32 %s17, %s24
      %p26 = scmp.eq.s32.totalorder %s25, 0
      %s28 = sadd.s32 %s27, 1
      %s29 = scalar_select %p26, %s27, %s28
      %p32 = pneg %p26
      %p33 = scmp.eq.s32.totalorder %s17, 1
      %p34 = por %p32, %p33
      %p35 = scmp.ne.s32.totalorder %s27, %s30
      %p36 = scmp.eq.s32.totalorder %s17, 0
      %p37 = por %p35, %p36
      %p38 = scmp.ne.s32.totalorder %s27, %s30
      %p39 = scmp.eq.s32.totalorder %s22, 1
      %p40 = por %p38, %p39
      %p41 = scmp.ne.s32.totalorder %s30, %s31
      %p42 = scmp.eq.s32.totalorder %s22, 0
      %p43 = por %p41, %p42
      %p44 = scmp.ne.s32.totalorder %s30, %s31
      %p45 = scmp.eq.s32.totalorder %s23, 1
      %p46 = por %p44, %p45
      %p48 = scmp.ne.s32.totalorder %s31, %s47
      %p49 = scmp.eq.s32.totalorder %s23, 0
      %p50 = por %p48, %p49
      %s52 = sadd.s32 %s51, 1
      %p55 = scmp.eq.s32.totalorder %s17, 1
      %p56 = scmp.ne.s32.totalorder %s51, %s53
      %p57 = scmp.eq.s32.totalorder %s17, 0
      %p58 = por %p56, %p57
      %p59 = scmp.ne.s32.totalorder %s51, %s53
      %p60 = scmp.eq.s32.totalorder %s22, 1
      %p61 = por %p59, %p60
      %p62 = scmp.ne.s32.totalorder %s53, %s54
      %p63 = scmp.eq.s32.totalorder %s22, 0
      %p64 = por %p62, %p63
      %p65 = scmp.ne.s32.totalorder %s53, %s54
      %p66 = scmp.eq.s32.totalorder %s23, 1
      %p67 = por %p65, %p66
      %p69 = scmp.ne.s32.totalorder %s54, %s68
      %p70 = scmp.eq.s32.totalorder %s23, 0
      %p71 = por %p69, %p70
      %s73 = sadd.s32 %s72, 1
      %p76 = scmp.eq.s32.totalorder %s17, 1
      %p77 = scmp.ne.s32.totalorder %s72, %s74
      %p78 = scmp.eq.s32.totalorder %s17, 0
      %p79 = por %p77, %p78
      %p80 = scmp.ne.s32.totalorder %s72, %s74
      %p81 = scmp.eq.s32.totalorder %s22, 1
      %p82 = por %p80, %p81
      %p83 = scmp.ne.s32.totalorder %s74, %s75
      %p84 = scmp.eq.s32.totalorder %s22, 0
      %p85 = por %p83, %p84
      %p86 = scmp.ne.s32.totalorder %s74, %s75
      %p87 = scmp.eq.s32.totalorder %s23, 1
      %p88 = por %p86, %p87
      %p90 = scmp.ne.s32.totalorder %s75, %s89
      %p91 = scmp.eq.s32.totalorder %s23, 0
      %p92 = por %p90, %p91
      %s94 = sadd.s32 %s93, 1
      %p97 = scmp.eq.s32.totalorder %s17, 1
      %p98 = scmp.ne.s32.totalorder %s93, %s95
      %p99 = scmp.eq.s32.totalorder %s17, 0
      %p100 = por %p98, %p99
      %p101 = scmp.ne.s32.totalorder %s93, %s95
      %p102 = scmp.eq.s32.totalorder %s22, 1
      %p103 = por %p101, %p102
      %p104 = scmp.ne.s32.totalorder %s95, %s96
      %p105 = scmp.eq.s32.totalorder %s22, 0
      %p106 = por %p104, %p105
      %p107 = scmp.ne.s32.totalorder %s95, %s96
      %p108 = scmp.eq.s32.totalorder %s23, 1
      %p109 = por %p107, %p108
      %p111 = scmp.ne.s32.totalorder %s96, %s110
      %p112 = scmp.eq.s32.totalorder %s23, 0
      %p113 = por %p111, %p112
      %s115 = sadd.s32 %s114, 1
      %p118 = scmp.eq.s32.totalorder %s17, 1
      %p119 = scmp.ne.s32.totalorder %s114, %s116
      %p120 = scmp.eq.s32.totalorder %s17, 0
      %p121 = por %p119, %p120
      %p122 = scmp.ne.s32.totalorder %s114, %s116
      %p123 = scmp.eq.s32.totalorder %s22, 1
      %p124 = por %p122, %p123
      %p125 = scmp.ne.s32.totalorder %s116, %s117
      %p126 = scmp.eq.s32.totalorder %s22, 0
      %p127 = por %p125, %p126
      %p128 = scmp.ne.s32.totalorder %s116, %s117
      %p129 = scmp.eq.s32.totalorder %s23, 1
      %p130 = por %p128, %p129
      %p132 = scmp.ne.s32.totalorder %s117, %s131
      %p133 = scmp.eq.s32.totalorder %s23, 0
      %p134 = por %p132, %p133
      %s136 = sadd.s32 %s135, 1
      %p139 = scmp.eq.s32.totalorder %s17, 1
      %p140 = scmp.ne.s32.totalorder %s135, %s137
      %p141 = scmp.eq.s32.totalorder %s17, 0
      %p142 = por %p140, %p141
      %p143 = scmp.ne.s32.totalorder %s135, %s137
      %p144 = scmp.eq.s32.totalorder %s22, 1
      %p145 = por %p143, %p144
      %p146 = scmp.ne.s32.totalorder %s137, %s138
      %p147 = scmp.eq.s32.totalorder %s22, 0
      %p148 = por %p146, %p147
      %p149 = scmp.ne.s32.totalorder %s137, %s138
      %p150 = scmp.eq.s32.totalorder %s23, 1
      %p151 = por %p149, %p150
      %p153 = scmp.ne.s32.totalorder %s138, %s152
      %p154 = scmp.eq.s32.totalorder %s23, 0
      %p155 = por %p153, %p154
      %s157 = sadd.s32 %s156, 1
      %p160 = scmp.eq.s32.totalorder %s17, 1
      %p161 = scmp.ne.s32.totalorder %s156, %s158
      %p162 = scmp.eq.s32.totalorder %s17, 0
      %p163 = por %p161, %p162
      %p164 = scmp.ne.s32.totalorder %s156, %s158
      %p165 = scmp.eq.s32.totalorder %s22, 1
      %p166 = por %p164, %p165
      %p167 = scmp.ne.s32.totalorder %s158, %s159
      %p168 = scmp.eq.s32.totalorder %s22, 0
      %p169 = por %p167, %p168
      %p170 = scmp.ne.s32.totalorder %s158, %s159
      %p171 = scmp.eq.s32.totalorder %s23, 1
      %p172 = por %p170, %p171
      %p174 = scmp.ne.s32.totalorder %s159, %s173
      %p175 = scmp.eq.s32.totalorder %s23, 0
      %p176 = por %p174, %p175
      %s177 = ssub.s32 %s17, %s24
      %p178 = scmp.eq.s32.totalorder %s177, 0
      %s180 = sadd.s32 %s179, 1
      %s181 = scalar_select %p178, %s179, %s180
      %p184 = pneg %p178
      %p185 = scmp.eq.s32.totalorder %s17, 1
      %p186 = por %p184, %p185
      %p187 = scmp.ne.s32.totalorder %s179, %s182
      %p188 = scmp.eq.s32.totalorder %s17, 0
      %p189 = por %p187, %p188
      %p190 = scmp.ne.s32.totalorder %s179, %s182
      %p191 = scmp.eq.s32.totalorder %s22, 1
      %p192 = por %p190, %p191
      %p193 = scmp.ne.s32.totalorder %s182, %s183
      %p194 = scmp.eq.s32.totalorder %s22, 0
      %p195 = por %p193, %p194
      %p196 = scmp.ne.s32.totalorder %s182, %s183
      %p197 = scmp.eq.s32.totalorder %s23, 1
      %p198 = por %p196, %p197
      %p200 = scmp.ne.s32.totalorder %s183, %s199
      %p201 = scmp.eq.s32.totalorder %s23, 0
      %p202 = por %p200, %p201
      %p203 = scmp.le.s32.totalorder 1, %s17
      %p204 = scmp.lt.s32.totalorder %s17, 3
      %p205 = pnand %p203, %p204
      %p206 = pneg %p205
      // Predicated region
      $region9: #{smaller_forward_pallas.1} parent=5 // pred_check
        _
      $region10: #{smaller_forward_pallas.1} parent=5 // pred_check_branch
        %208 = sbr.rel (%p205) target = $region12
      $region11: #{smaller_forward_pallas.1} parent=5 // pred_region
        %s209 = ssub.s32 %s17, 1
        // Predicated region
        $region13: #{smaller_forward_pallas.1} parent=11 // pred_check
          %p210 = pneg %p64
        $region14: #{smaller_forward_pallas.1} parent=11 // pred_check_branch
          %212 = sbr.rel (%p210) target = $region16
        $region15: #{smaller_forward_pallas.1} parent=11 // pred_region
          _
        $region16: #{smaller_forward_pallas.1} parent=11 // pred_fallthru
          _
        // Predicated region
        $region17: #{smaller_forward_pallas.1} parent=11 // pred_check
          %p213 = pneg %p85
        $region18: #{smaller_forward_pallas.1} parent=11 // pred_check_branch
          %215 = sbr.rel (%p213) target = $region20
        $region19: #{smaller_forward_pallas.1} parent=11 // pred_region
          _
        $region20: #{smaller_forward_pallas.1} parent=11 // pred_fallthru
          _
        // Predicated region
        $region21: #{smaller_forward_pallas.1} parent=11 // pred_check
          %p216 = pneg %p106
        $region22: #{smaller_forward_pallas.1} parent=11 // pred_check_branch
          %218 = sbr.rel (%p216) target = $region24
        $region23: #{smaller_forward_pallas.1} parent=11 // pred_region
          %s220 = ssub.s32 27648, 27648
          %221 = vsyncadd [#allocation4], %s220
          %s222 = sshll.u32 [#allocation3], 4
          %s223 = int_to_ptr.vmem [resolvable:$true] %s222
          %228 = dma.hbm_to_vmem [thread:$0]  %s3, 27648, %s223, [#allocation4], 256, 256, 16
        $region24: #{smaller_forward_pallas.1} parent=11 // pred_fallthru
          _
        // Predicated region
        $region25: #{smaller_forward_pallas.1} parent=11 // pred_check
          %p229 = pneg %p127
        $region26: #{smaller_forward_pallas.1} parent=11 // pred_check_branch
          %231 = sbr.rel (%p229) target = $region28
        $region27: #{smaller_forward_pallas.1} parent=11 // pred_region
          _
        $region28: #{smaller_forward_pallas.1} parent=11 // pred_fallthru
          _
        // Predicated region
        $region29: #{smaller_forward_pallas.1} parent=11 // pred_check
          %p232 = pneg %p148
        $region30: #{smaller_forward_pallas.1} parent=11 // pred_check_branch
          %234 = sbr.rel (%p232) target = $region32
        $region31: #{smaller_forward_pallas.1} parent=11 // pred_region
          _
        $region32: #{smaller_forward_pallas.1} parent=11 // pred_fallthru
          _
        // Predicated region
        $region33: #{smaller_forward_pallas.1} parent=11 // pred_check
          %p235 = pneg %p169
        $region34: #{smaller_forward_pallas.1} parent=11 // pred_check_branch
          %237 = sbr.rel (%p235) target = $region36
        $region35: #{smaller_forward_pallas.1} parent=11 // pred_region
          _
        $region36: #{smaller_forward_pallas.1} parent=11 // pred_fallthru
          _
      $region12: #{smaller_forward_pallas.1} parent=5 // pred_fallthru
        _
      %p238 = scmp.lt.s32.totalorder %s17, 2
      // Predicated region
      $region37: #{smaller_forward_pallas.1} parent=5 // pred_check
        %p239 = pneg %p238
      $region38: #{smaller_forward_pallas.1} parent=5 // pred_check_branch
        %241 = sbr.rel (%p239) target = $region40
      $region39: #{smaller_forward_pallas.1} parent=5 // pred_region
        // Predicated region
        $region41: #{smaller_forward_pallas.1} parent=39 // pred_check
          %p242 = pneg %p37
        $region42: #{smaller_forward_pallas.1} parent=39 // pred_check_branch
          %244 = sbr.rel (%p242) target = $region44
        $region43: #{smaller_forward_pallas.1} parent=39 // pred_region
          %p245 = scmp.lt.s32.totalorder %s17, 1
          %s246 = scalar_select %p245, %s17, 1
          %s247 = smul.addr %s246, 3
          %s248 = smul.addr %s247, 8
          %s249 = scalar_lea.vmem %s0, %s248
        $region44: #{smaller_forward_pallas.1} parent=39 // pred_fallthru
          _
      $region40: #{smaller_forward_pallas.1} parent=5 // pred_fallthru
        _
      %p250 = scmp.le.s32.totalorder 1, %s17
      %p251 = scmp.lt.s32.totalorder %s17, 3
      %p252 = pnand %p250, %p251
      %p253 = pneg %p252
      // Predicated region
      $region45: #{smaller_forward_pallas.1} parent=5 // pred_check
        _
      $region46: #{smaller_forward_pallas.1} parent=5 // pred_check_branch
        %255 = sbr.rel (%p252) target = $region48
      $region47: #{smaller_forward_pallas.1} parent=5 // pred_region
        %s256 = ssub.s32 %s17, 1
        // Predicated region
        $region49: #{smaller_forward_pallas.1} parent=47 // pred_check
          %p257 = pneg %p106
        $region50: #{smaller_forward_pallas.1} parent=47 // pred_check_branch
          %259 = sbr.rel (%p257) target = $region52
        $region51: #{smaller_forward_pallas.1} parent=47 // pred_region
          %260 = dma.done [#allocation4], 27648
        $region52: #{smaller_forward_pallas.1} parent=47 // pred_fallthru
          _
        %p261 = scmp.lt.s32.totalorder %s22, 1
        %s262 = scalar_select %p261, %s22, 1
        %s263 = smul.addr %s262, 3
        %s264 = smul.addr %s263, 8
        %s265 = scalar_lea.vmem %s0, %s264
        %p266 = pneg %p43
        %p267 = pneg %p40
        %p268 = pneg %p64
        %p269 = pneg %p61
        %p270 = pneg %p85
        %p271 = pneg %p82
        %p272 = pneg %p106
        %p273 = pneg %p103
        %p274 = pneg %p127
        %p275 = pneg %p124
        %p276 = pneg %p148
        %p277 = pneg %p145
        %p278 = pneg %p169
        %p279 = pneg %p166
        %p280 = pneg %p195
        %p281 = pneg %p192
        %s282 = sand.u32 %s182, 1
        %s283 = scalar_lea.sflag [#allocation5], %s282
        %s284 = sand.u32 %s182, 1
        %s285 = scalar_lea.vmem [#allocation6], %s284
        %p286 = scmp.lt.s32.totalorder %s22, 1
        %s287 = scalar_select %p286, %s22, 1
        %s288 = smul.addr %s287, 3
        %s289 = smul.addr %s288, 8
        %s290 = scalar_lea.vmem %s0, %s289
        %v292 = vld [vmem:[%s290] sm:$0xff]
        %v293 = vld [vmem:[%s290 + $0x8] sm:$0xff]
        %v294 = vpack.c.bf16 %v293, %v292
        %v295 = vld [vmem:[%s1] sm:$0xff]
        %v296 = vld [vmem:[%s1 + $0x8] sm:$0xff]
        %v297 = vld [vmem:[%s1 + $0x10] sm:$0xff]
        %v298 = vld [vmem:[%s1 + $0x18] sm:$0xff]
        %v299 = vld [vmem:[%s1 + $0x20] sm:$0xff]
        %v300 = vld [vmem:[%s1 + $0x28] sm:$0xff]
        %v301 = vld [vmem:[%s1 + $0x30] sm:$0x77]
        %v302 = vld [vmem:[%s290 + $0x1] sm:$0xff]
        %v303 = vld [vmem:[%s290 + $0x9] sm:$0xff]
        %v304 = vpack.c.bf16 %v303, %v302
        %s305 = scalar_lea.vmem %s1, 56
        %v306 = vld [vmem:[%s305] sm:$0xff]
        %v307 = vld [vmem:[%s305 + $0x8] sm:$0xff]
        %v308 = vld [vmem:[%s305 + $0x10] sm:$0xff]
        %v309 = vld [vmem:[%s305 + $0x18] sm:$0xff]
        %v310 = vld [vmem:[%s305 + $0x20] sm:$0xff]
        %v311 = vld [vmem:[%s305 + $0x28] sm:$0xff]
        %v312 = vld [vmem:[%s305 + $0x30] sm:$0x77]
        %v320 = vunpack.c.l.b16 %v306
        %v321 = vunpack.c.h.b16 %v306
        %v322 = vunpack.c.l.b16 %v307
        %v323 = vunpack.c.h.b16 %v307
        %v324 = vunpack.c.l.b16 %v308
        %v325 = vunpack.c.h.b16 %v308
        %v326 = vunpack.c.l.b16 %v309
        %v327 = vunpack.c.h.b16 %v309
        %v328 = vunpack.c.l.b16 %v310
        %v329 = vunpack.c.h.b16 %v310
        %v330 = vunpack.c.l.b16 %v311
        %v331 = vunpack.c.h.b16 %v311
        %v332 = vunpack.c.l.b16 %v312
        %v333 = vunpack.c.h.b16 %v312
        %v334 = vpack.c.b16 %v322, %v320
        %v335 = vpack.c.b16 %v323, %v321
        %v336 = vpack.c.b16 %v326, %v324
        %v337 = vpack.c.b16 %v327, %v325
        %v338 = vpack.c.b16 %v330, %v328
        %v339 = vpack.c.b16 %v331, %v329
        %v340 = vpack.c.b16 %v332, %v332
        %v341 = vpack.c.b16 %v333, %v333
        %vm348 = vcmask 441344
        %v350 = vsel %vm348, %v304, 0
        %vm352 = vcmask 1042432
        %v354 = vsel %vm352, %v340, 0
        %v357 = vsel %vm352, %v341, 0
        %359 = vmatprep.subr.bf16.mxu0 %v335
        %360 = vmatpush1.bf16.msra.mxu0 %v334
        %361 = vmatprep.subr.bf16.mxu0 %v337
        %362 = vmatpush1.bf16.msra.mxu0 %v336
        %363 = vmatprep.subr.bf16.mxu0 %v339
        %364 = vmatpush1.bf16.msra.mxu0 %v338
        %365 = vmatprep.subr.bf16.mxu0 %v357
        %366 = vmatpush1.bf16.msra.mxu0 %v354
        %367 = vmatprep.subr.bf16.mxu0 0
        %368 = vmatpush1.bf16.msra.mxu0 0
        %369 = vmatprep.subr.bf16.mxu0 0
        %370 = vmatpush1.bf16.msra.mxu0 0
        %371 = vmatprep.subr.bf16.mxu0 0
        %372 = vmatpush1.bf16.msra.mxu0 0
        %373 = vmatprep.subr.bf16.mxu0 0
        %374 = vmatpush1.bf16.msra.mxu0 0
        %375 = vmatprep.subr.bf16.mxu0 0
        %376 = vmatpush1.bf16.msra.mxu0 0
        %377 = vmatprep.subr.bf16.mxu0 0
        %378 = vmatpush1.bf16.msra.mxu0 0
        %379 = vmatprep.subr.bf16.mxu0 0
        %380 = vmatpush1.bf16.msra.mxu0 0
        %381 = vmatprep.subr.bf16.mxu0 0
        %382 = vmatpush1.bf16.msra.mxu0 0
        %383 = vmatprep.subr.bf16.mxu0 0
        %384 = vmatpush1.bf16.msra.mxu0 0
        %385 = vmatprep.subr.bf16.mxu0 0
        %386 = vmatpush1.bf16.msra.mxu0 0
        %387 = vmatprep.subr.bf16.mxu0 0
        %388 = vmatpush1.bf16.msra.mxu0 0
        %389 = vmatprep.subr.bf16.mxu0 0
        %390 = vmatpush1.bf16.msra.mxu0 0
        %391 = vmatprep.mubr.bf16.mxu0 0
        %392 = vmatmul.mubr.bf16.gmra.mrb[0].mxu0 %v350
        %v393 = vpop.f32.mrb[0].mxu0
        %v394 = vadd.f32 0.0, %v393
        %v395 = vpop.f32.mrb[0].mxu0
        %v396 = vadd.f32 0.0, %v395
        %v397 = vpop.f32.mrb[0].mxu0
        %v398 = vadd.f32 0.0, %v397
        %v399 = vpop.f32.mrb[0].mxu0
        %v400 = vadd.f32 0.0, %v399
        %401 = vdwg.mxu0
        %v409 = vunpack.c.l.b16 %v295
        %v410 = vunpack.c.h.b16 %v295
        %v411 = vunpack.c.l.b16 %v296
        %v412 = vunpack.c.h.b16 %v296
        %v413 = vunpack.c.l.b16 %v297
        %v414 = vunpack.c.h.b16 %v297
        %v415 = vunpack.c.l.b16 %v298
        %v416 = vunpack.c.h.b16 %v298
        %v417 = vunpack.c.l.b16 %v299
        %v418 = vunpack.c.h.b16 %v299
        %v419 = vunpack.c.l.b16 %v300
        %v420 = vunpack.c.h.b16 %v300
        %v421 = vunpack.c.l.b16 %v301
        %v422 = vunpack.c.h.b16 %v301
        %v423 = vpack.c.b16 %v411, %v409
        %v424 = vpack.c.b16 %v412, %v410
        %v425 = vpack.c.b16 %v415, %v413
        %v426 = vpack.c.b16 %v416, %v414
        %v427 = vpack.c.b16 %v419, %v417
        %v428 = vpack.c.b16 %v420, %v418
        %v429 = vpack.c.b16 %v421, %v421
        %v430 = vpack.c.b16 %v422, %v422
        %v438 = vsel %vm348, %v294, 0
        %v441 = vsel %vm352, %v429, 0
        %v444 = vsel %vm352, %v430, 0
        %446 = vmatprep.subr.bf16.mxu0 %v424
        %447 = vmatpush1.bf16.msra.mxu0 %v423
        %448 = vmatprep.subr.bf16.mxu0 %v426
        %449 = vmatpush1.bf16.msra.mxu0 %v425
        %450 = vmatprep.subr.bf16.mxu0 %v428
        %451 = vmatpush1.bf16.msra.mxu0 %v427
        %452 = vmatprep.subr.bf16.mxu0 %v444
        %453 = vmatpush1.bf16.msra.mxu0 %v441
        %454 = vmatprep.subr.bf16.mxu0 0
        %455 = vmatpush1.bf16.msra.mxu0 0
        %456 = vmatprep.subr.bf16.mxu0 0
        %457 = vmatpush1.bf16.msra.mxu0 0
        %458 = vmatprep.subr.bf16.mxu0 0
        %459 = vmatpush1.bf16.msra.mxu0 0
        %460 = vmatprep.subr.bf16.mxu0 0
        %461 = vmatpush1.bf16.msra.mxu0 0
        %462 = vmatprep.subr.bf16.mxu0 0
        %463 = vmatpush1.bf16.msra.mxu0 0
        %464 = vmatprep.subr.bf16.mxu0 0
        %465 = vmatpush1.bf16.msra.mxu0 0
        %466 = vmatprep.subr.bf16.mxu0 0
        %467 = vmatpush1.bf16.msra.mxu0 0
        %468 = vmatprep.subr.bf16.mxu0 0
        %469 = vmatpush1.bf16.msra.mxu0 0
        %470 = vmatprep.subr.bf16.mxu0 0
        %471 = vmatpush1.bf16.msra.mxu0 0
        %472 = vmatprep.subr.bf16.mxu0 0
        %473 = vmatpush1.bf16.msra.mxu0 0
        %474 = vmatprep.subr.bf16.mxu0 0
        %475 = vmatpush1.bf16.msra.mxu0 0
        %476 = vmatprep.subr.bf16.mxu0 0
        %477 = vmatpush1.bf16.msra.mxu0 0
        %478 = vmatprep.mubr.bf16.mxu0 0
        %479 = vmatmul.mubr.bf16.gmra.mrb[0].mxu0 %v438
        %v480 = vpop.f32.mrb[0].mxu0
        %v481 = vadd.f32 %v394, %v480
        %v482 = vpop.f32.mrb[0].mxu0
        %v483 = vadd.f32 %v396, %v482
        %v484 = vpop.f32.mrb[0].mxu0
        %v485 = vadd.f32 %v398, %v484
        %v486 = vpop.f32.mrb[0].mxu0
        %v487 = vadd.f32 %v400, %v486
        %488 = vdwg.mxu0
        %v489 = vld [vmem:[%s290 + $0x2] sm:$0xff]
        %v490 = vld [vmem:[%s290 + $0xa] sm:$0xff]
        %v491 = vpack.c.bf16 %v490, %v489
        %s492 = scalar_lea.vmem %s1, 112
        %v493 = vld [vmem:[%s492] sm:$0xff]
        %v494 = vld [vmem:[%s492 + $0x8] sm:$0xff]
        %v495 = vld [vmem:[%s492 + $0x10] sm:$0xff]
        %v496 = vld [vmem:[%s492 + $0x18] sm:$0xff]
        %v497 = vld [vmem:[%s492 + $0x20] sm:$0xff]
        %v498 = vld [vmem:[%s492 + $0x28] sm:$0xff]
        %v499 = vld [vmem:[%s492 + $0x30] sm:$0x77]
        %v507 = vunpack.c.l.b16 %v493
        %v508 = vunpack.c.h.b16 %v493
        %v509 = vunpack.c.l.b16 %v494
        %v510 = vunpack.c.h.b16 %v494
        %v511 = vunpack.c.l.b16 %v495
        %v512 = vunpack.c.h.b16 %v495
        %v513 = vunpack.c.l.b16 %v496
        %v514 = vunpack.c.h.b16 %v496
        %v515 = vunpack.c.l.b16 %v497
        %v516 = vunpack.c.h.b16 %v497
        %v517 = vunpack.c.l.b16 %v498
        %v518 = vunpack.c.h.b16 %v498
        %v519 = vunpack.c.l.b16 %v499
        %v520 = vunpack.c.h.b16 %v499
        %v521 = vpack.c.b16 %v509, %v507
        %v522 = vpack.c.b16 %v510, %v508
        %v523 = vpack.c.b16 %v513, %v511
        %v524 = vpack.c.b16 %v514, %v512
        %v525 = vpack.c.b16 %v517, %v515
        %v526 = vpack.c.b16 %v518, %v516
        %v527 = vpack.c.b16 %v519, %v519
        %v528 = vpack.c.b16 %v520, %v520
        %v536 = vsel %vm348, %v491, 0
        %v539 = vsel %vm352, %v527, 0
        %v542 = vsel %vm352, %v528, 0
        %544 = vmatprep.subr.bf16.mxu0 %v522
        %545 = vmatpush1.bf16.msra.mxu0 %v521
        %546 = vmatprep.subr.bf16.mxu0 %v524
        %547 = vmatpush1.bf16.msra.mxu0 %v523
        %548 = vmatprep.subr.bf16.mxu0 %v526
        %549 = vmatpush1.bf16.msra.mxu0 %v525
        %550 = vmatprep.subr.bf16.mxu0 %v542
        %551 = vmatpush1.bf16.msra.mxu0 %v539
        %552 = vmatprep.subr.bf16.mxu0 0
        %553 = vmatpush1.bf16.msra.mxu0 0
        %554 = vmatprep.subr.bf16.mxu0 0
        %555 = vmatpush1.bf16.msra.mxu0 0
        %556 = vmatprep.subr.bf16.mxu0 0
        %557 = vmatpush1.bf16.msra.mxu0 0
        %558 = vmatprep.subr.bf16.mxu0 0
        %559 = vmatpush1.bf16.msra.mxu0 0
        %560 = vmatprep.subr.bf16.mxu0 0
        %561 = vmatpush1.bf16.msra.mxu0 0
        %562 = vmatprep.subr.bf16.mxu0 0
        %563 = vmatpush1.bf16.msra.mxu0 0
        %564 = vmatprep.subr.bf16.mxu0 0
        %565 = vmatpush1.bf16.msra.mxu0 0
        %566 = vmatprep.subr.bf16.mxu0 0
        %567 = vmatpush1.bf16.msra.mxu0 0
        %568 = vmatprep.subr.bf16.mxu0 0
        %569 = vmatpush1.bf16.msra.mxu0 0
        %570 = vmatprep.subr.bf16.mxu0 0
        %571 = vmatpush1.bf16.msra.mxu0 0
        %572 = vmatprep.subr.bf16.mxu0 0
        %573 = vmatpush1.bf16.msra.mxu0 0
        %574 = vmatprep.subr.bf16.mxu0 0
        %575 = vmatpush1.bf16.msra.mxu0 0
        %576 = vmatprep.mubr.bf16.mxu0 0
        %577 = vmatmul.mubr.bf16.gmra.mrb[0].mxu0 %v536
        %v578 = vpop.f32.mrb[0].mxu0
        %v579 = vadd.f32 0.0, %v578
        %v580 = vpop.f32.mrb[0].mxu0
        %v581 = vadd.f32 0.0, %v580
        %v582 = vpop.f32.mrb[0].mxu0
        %v583 = vadd.f32 0.0, %v582
        %v584 = vpop.f32.mrb[0].mxu0
        %v585 = vadd.f32 0.0, %v584
        %586 = vdwg.mxu0
        %v587 = vadd.f32 %v481, %v579
        %v588 = vadd.f32 %v483, %v581
        %v589 = vadd.f32 %v485, %v583
        %v590 = vadd.f32 %v487, %v585
        %v591 = vld [vmem:[%s2] sm:$0x3]
        %v593 = vlaneseq
        %v594 = vshrl.u32 %v593, 7
        %v595 = vsub.s32 0, %v594
        %v596 = vrot.slane %v591, %v595
        %v597 = vlaneseq
        %v598 = vshrl.u32 %v597, 7
        %v599 = vsub.s32 1, %v598
        %v600 = vrot.slane %v591, %v599
        %v603 = vadd.f32 %v587, %v596
        %v604 = vadd.f32 %v588, %v600
        %v605 = vadd.f32 %v589, %v596
        %v606 = vadd.f32 %v590, %v600
        %v607 = vmax.f32 %v603, 0.0
        %v608 = vmax.f32 %v604, 0.0
        %v609 = vmax.f32 %v605, 0.0
        %v610 = vmax.f32 %v606, 0.0
        %v611 = vlaneseq
        %vm612 = vcmp.ge.s32.totalorder %v611, 0
        %vm613 = vcmp.lt.s32.totalorder %v611, 288
        %vm614 = vmand %vm612, %vm613
        %615 = vst.msk [vmem:[#allocation2] ss:$8 sm:$0x7] %vm614, 0.0
        %616 = vst.msk [vmem:[#allocation2] ss:$8 sm:$0x0] %vm614, 0.0
        %s617 = scalar_lea.vmem [#allocation2], 49
        %618 = vst.msk [vmem:[%s617] ss:$8 sm:$0x7] %vm614, 0.0
        %619 = vst.msk [vmem:[%s617] ss:$8 sm:$0x0] %vm614, 0.0
        %vm620 = vcmask 130048
        %621 = vst.msk [vmem:[#allocation2] sm:$0xff] %vm620, 0.0
        %622 = vst.msk [vmem:[#allocation2 + $0x18] sm:$0xff] %vm620, 0.0
        %vm623 = vcmask 123904
        %624 = vst.msk [vmem:[#allocation2 + $0x30] sm:$0x3] %vm623, 0.0
        %vm625 = vcmask 261248
        %626 = vst.msk [vmem:[#allocation2 + $0x10] sm:$0xff] %vm625, 0.0
        %627 = vst.msk [vmem:[#allocation2 + $0x28] sm:$0xff] %vm625, 0.0
        %vm628 = vcmask 255104
        %629 = vst.msk [vmem:[#allocation2 + $0x40] sm:$0x3] %vm628, 0.0
        %vm634 = vcmask 1040384
        %v635 = vrot.slane %v607, 7
        %v636 = vrot.slane %v608, 7
        %v637 = vrot.slane %v609, 7
        %v638 = vsel %vm634, %v635, %v637
        %v639 = vrot.slane %v610, 7
        %v640 = vsel %vm634, %v636, %v639
        %641 = vrot.lane.b32.xlu0 %v635, 16
        %v642 = vpop.permute.xlu0 %641
        %643 = vrot.lane.b32.xlu0 %v636, 16
        %v644 = vpop.permute.xlu0 %643
        %645 = vrot.lane.b32.xlu0 %v638, 16
        %v646 = vpop.permute.xlu0 %645
        %647 = vrot.lane.b32.xlu0 %v640, 16
        %v648 = vpop.permute.xlu0 %647
        %649 = vrot.lane.b32.xlu0 %v637, 16
        %v650 = vpop.permute.xlu0 %649
        %651 = vrot.lane.b32.xlu0 %v639, 16
        %v652 = vpop.permute.xlu0 %651
        %v653 = vsel %vm620, %v642, %v644
        %v654 = vsel %vm620, %v646, %v648
        %v655 = vsel %vm620, %v650, %v652
        %vm665 = vcmask 1047681
        %666 = vst.msk [vmem:[#allocation2] sm:$0xfe] %vm665, %v642
        %667 = vst [vmem:[#allocation2 + $0x8] sm:$0xfe] %v653
        %vm668 = vcmask 130049
        %669 = vst.msk [vmem:[#allocation2 + $0x10] sm:$0xfe] %vm668, %v644
        %vm670 = vcmask 1047680
        %671 = vst.msk [vmem:[#allocation2 + $0x18] sm:$0xff] %vm670, %v646
        %672 = vst [vmem:[#allocation2 + $0x20] sm:$0xff] %v654
        %673 = vst.msk [vmem:[#allocation2 + $0x28] sm:$0xff] %vm620, %v648
        %vm674 = vcmask 1040512
        %675 = vst.msk [vmem:[#allocation2 + $0x30] sm:$0x1] %vm674, %v650
        %676 = vst [vmem:[#allocation2 + $0x38] sm:$0x1] %v655
        %vm677 = vcmask 122880
        %678 = vst.msk [vmem:[#allocation2 + $0x40] sm:$0x1] %vm677, %v652
        %v679 = vld [vmem:[#allocation2] sm:$0xff]
        %v680 = vld [vmem:[#allocation2 + $0x8] sm:$0xff]
        %v681 = vld [vmem:[#allocation2 + $0x10] sm:$0xff]
        %v682 = vld [vmem:[#allocation2 + $0x18] sm:$0xff]
        %v683 = vld [vmem:[#allocation2 + $0x20] sm:$0xff]
        %v684 = vld [vmem:[#allocation2 + $0x28] sm:$0xff]
        %v685 = vpack.c.bf16 %v682, %v679
        %v686 = vpack.c.bf16 %v683, %v680
        %v687 = vpack.c.bf16 %v684, %v681
        %v688 = vld [vmem:[#allocation3] sm:$0xff]
        %v689 = vld [vmem:[#allocation3 + $0x8] sm:$0xff]
        %v690 = vld [vmem:[#allocation3 + $0x10] sm:$0xff]
        %v691 = vld [vmem:[#allocation3 + $0x18] sm:$0xff]
        %v692 = vld [vmem:[#allocation3 + $0x20] sm:$0xff]
        %v693 = vld [vmem:[#allocation3 + $0x28] sm:$0xff]
        %v694 = vld [vmem:[#allocation3 + $0x30] sm:$0xff]
        %v695 = vld [vmem:[#allocation3 + $0x38] sm:$0xff]
        %v696 = vld [vmem:[#allocation3 + $0x40] sm:$0xff]
        %v697 = vld [vmem:[#allocation3 + $0x48] sm:$0xff]
        %v698 = vld [vmem:[#allocation3 + $0x50] sm:$0xff]
        %v699 = vld [vmem:[#allocation3 + $0x58] sm:$0xff]
        %v700 = vld [vmem:[#allocation3 + $0x60] sm:$0xff]
        %v701 = vld [vmem:[#allocation3 + $0x68] sm:$0xff]
        %v702 = vld [vmem:[#allocation3 + $0x70] sm:$0xff]
        %v703 = vld [vmem:[#allocation3 + $0x78] sm:$0xff]
        %v704 = vld [vmem:[#allocation3 + $0x80] sm:$0xff]
        %v705 = vld [vmem:[#allocation3 + $0x88] sm:$0xff]
        %v706 = vld [vmem:[#allocation3 + $0x90] sm:$0xff]
        %v707 = vld [vmem:[#allocation3 + $0x98] sm:$0xff]
        %v708 = vld [vmem:[#allocation3 + $0xa0] sm:$0xff]
        %v709 = vld [vmem:[#allocation3 + $0xa8] sm:$0xff]
        %v710 = vld [vmem:[#allocation3 + $0xb0] sm:$0xff]
        %v711 = vld [vmem:[#allocation3 + $0xb8] sm:$0xff]
        %v712 = vld [vmem:[#allocation3 + $0xc0] sm:$0xff]
        %v713 = vld [vmem:[#allocation3 + $0xc8] sm:$0xff]
        %v714 = vld [vmem:[#allocation3 + $0xd0] sm:$0xff]
        %v715 = vld [vmem:[#allocation3 + $0xd8] sm:$0xff]
        %v716 = vld [vmem:[#allocation3 + $0xe0] sm:$0xff]
        %v717 = vld [vmem:[#allocation3 + $0xe8] sm:$0xff]
        %v718 = vld [vmem:[#allocation3 + $0xf0] sm:$0xff]
        %v719 = vld [vmem:[#allocation3 + $0xf8] sm:$0xff]
        %v720 = vld [vmem:[#allocation3 + $0x100] sm:$0xff]
        %v721 = vld [vmem:[#allocation3 + $0x108] sm:$0xff]
        %v722 = vld [vmem:[#allocation3 + $0x110] sm:$0xff]
        %v723 = vld [vmem:[#allocation3 + $0x118] sm:$0xff]
        %v724 = vld [vmem:[#allocation3 + $0x120] sm:$0xff]
        %v725 = vld [vmem:[#allocation3 + $0x128] sm:$0xff]
        %v726 = vld [vmem:[#allocation3 + $0x130] sm:$0xff]
        %v727 = vld [vmem:[#allocation3 + $0x138] sm:$0xff]
        %v728 = vld [vmem:[#allocation3 + $0x140] sm:$0xff]
        %v729 = vld [vmem:[#allocation3 + $0x148] sm:$0xff]
        %v730 = vld [vmem:[#allocation3 + $0x150] sm:$0xff]
        %v731 = vld [vmem:[#allocation3 + $0x158] sm:$0xff]
        %v732 = vld [vmem:[#allocation3 + $0x160] sm:$0xff]
        %v733 = vld [vmem:[#allocation3 + $0x168] sm:$0xff]
        %v734 = vld [vmem:[#allocation3 + $0x170] sm:$0xff]
        %v735 = vld [vmem:[#allocation3 + $0x178] sm:$0xff]
        %v736 = vld [vmem:[#allocation3 + $0x180] sm:$0xff]
        %v737 = vld [vmem:[#allocation3 + $0x188] sm:$0xff]
        %v738 = vld [vmem:[#allocation3 + $0x190] sm:$0xff]
        %v739 = vld [vmem:[#allocation3 + $0x198] sm:$0xff]
        %v740 = vld [vmem:[#allocation3 + $0x1a0] sm:$0xff]
        %v741 = vld [vmem:[#allocation3 + $0x1a8] sm:$0xff]
        %v742 = vld [vmem:[#allocation3 + $0x1b0] sm:$0xff]
        %v743 = vld [vmem:[#allocation3 + $0x1b8] sm:$0xff]
        %v744 = vld [vmem:[#allocation3 + $0x1c0] sm:$0xff]
        %v745 = vld [vmem:[#allocation3 + $0x1c8] sm:$0xff]
        %v746 = vld [vmem:[#allocation3 + $0x1d0] sm:$0xff]
        %v747 = vld [vmem:[#allocation3 + $0x1d8] sm:$0xff]
        %v748 = vld [vmem:[#allocation3 + $0x1e0] sm:$0xff]
        %v749 = vld [vmem:[#allocation3 + $0x1e8] sm:$0xff]
        %v750 = vld [vmem:[#allocation3 + $0x1f0] sm:$0xff]
        %v751 = vld [vmem:[#allocation3 + $0x1f8] sm:$0xff]
        %v752 = vld [vmem:[#allocation3 + $0x200] sm:$0xff]
        %v753 = vld [vmem:[#allocation3 + $0x208] sm:$0xff]
        %v754 = vld [vmem:[#allocation3 + $0x210] sm:$0xff]
        %v755 = vld [vmem:[#allocation3 + $0x218] sm:$0xff]
        %v756 = vld [vmem:[#allocation3 + $0x220] sm:$0xff]
        %v757 = vld [vmem:[#allocation3 + $0x228] sm:$0xff]
        %v758 = vld [vmem:[#allocation3 + $0x230] sm:$0xff]
        %v759 = vld [vmem:[#allocation3 + $0x238] sm:$0xff]
        %v760 = vld [vmem:[#allocation2] sm:$0xfe]
        %v761 = vld [vmem:[#allocation2 + $0x8] sm:$0xfe]
        %v762 = vld [vmem:[#allocation2 + $0x10] sm:$0xfe]
        %v763 = vld [vmem:[#allocation2 + $0x30] sm:$0x1]
        %v764 = vld [vmem:[#allocation2 + $0x38] sm:$0x1]
        %v765 = vld [vmem:[#allocation2 + $0x40] sm:$0x1]
        %v766 = vpack.c.bf16 %v682, %v760
        %v767 = vpack.c.bf16 %v683, %v761
        %v768 = vpack.c.bf16 %v684, %v762
        %v769 = vpack.c.bf16 %v763, %v763
        %v770 = vpack.c.bf16 %v764, %v764
        %v771 = vpack.c.bf16 %v765, %v765
        %s772 = scalar_lea.vmem [#allocation3], 576
        %v773 = vld [vmem:[%s772] sm:$0xff]
        %v774 = vld [vmem:[%s772 + $0x8] sm:$0xff]
        %v775 = vld [vmem:[%s772 + $0x10] sm:$0xff]
        %v776 = vld [vmem:[%s772 + $0x18] sm:$0xff]
        %v777 = vld [vmem:[%s772 + $0x20] sm:$0xff]
        %v778 = vld [vmem:[%s772 + $0x28] sm:$0xff]
        %v779 = vld [vmem:[%s772 + $0x30] sm:$0xff]
        %v780 = vld [vmem:[%s772 + $0x38] sm:$0xff]
        %v781 = vld [vmem:[%s772 + $0x40] sm:$0xff]
        %v782 = vld [vmem:[%s772 + $0x48] sm:$0xff]
        %v783 = vld [vmem:[%s772 + $0x50] sm:$0xff]
        %v784 = vld [vmem:[%s772 + $0x58] sm:$0xff]
        %v785 = vld [vmem:[%s772 + $0x60] sm:$0xff]
        %v786 = vld [vmem:[%s772 + $0x68] sm:$0xff]
        %v787 = vld [vmem:[%s772 + $0x70] sm:$0xff]
        %v788 = vld [vmem:[%s772 + $0x78] sm:$0xff]
        %v789 = vld [vmem:[%s772 + $0x80] sm:$0xff]
        %v790 = vld [vmem:[%s772 + $0x88] sm:$0xff]
        %v791 = vld [vmem:[%s772 + $0x90] sm:$0xff]
        %v792 = vld [vmem:[%s772 + $0x98] sm:$0xff]
        %v793 = vld [vmem:[%s772 + $0xa0] sm:$0xff]
        %v794 = vld [vmem:[%s772 + $0xa8] sm:$0xff]
        %v795 = vld [vmem:[%s772 + $0xb0] sm:$0xff]
        %v796 = vld [vmem:[%s772 + $0xb8] sm:$0xff]
        %v797 = vld [vmem:[%s772 + $0xc0] sm:$0xff]
        %v798 = vld [vmem:[%s772 + $0xc8] sm:$0xff]
        %v799 = vld [vmem:[%s772 + $0xd0] sm:$0xff]
        %v800 = vld [vmem:[%s772 + $0xd8] sm:$0xff]
        %v801 = vld [vmem:[%s772 + $0xe0] sm:$0xff]
        %v802 = vld [vmem:[%s772 + $0xe8] sm:$0xff]
        %v803 = vld [vmem:[%s772 + $0xf0] sm:$0xff]
        %v804 = vld [vmem:[%s772 + $0xf8] sm:$0xff]
        %v805 = vld [vmem:[%s772 + $0x100] sm:$0xff]
        %v806 = vld [vmem:[%s772 + $0x108] sm:$0xff]
        %v807 = vld [vmem:[%s772 + $0x110] sm:$0xff]
        %v808 = vld [vmem:[%s772 + $0x118] sm:$0xff]
        %v809 = vld [vmem:[%s772 + $0x120] sm:$0xff]
        %v810 = vld [vmem:[%s772 + $0x128] sm:$0xff]
        %v811 = vld [vmem:[%s772 + $0x130] sm:$0xff]
        %v812 = vld [vmem:[%s772 + $0x138] sm:$0xff]
        %v813 = vld [vmem:[%s772 + $0x140] sm:$0xff]
        %v814 = vld [vmem:[%s772 + $0x148] sm:$0xff]
        %v815 = vld [vmem:[%s772 + $0x150] sm:$0xff]
        %v816 = vld [vmem:[%s772 + $0x158] sm:$0xff]
        %v817 = vld [vmem:[%s772 + $0x160] sm:$0xff]
        %v818 = vld [vmem:[%s772 + $0x168] sm:$0xff]
        %v819 = vld [vmem:[%s772 + $0x170] sm:$0xff]
        %v820 = vld [vmem:[%s772 + $0x178] sm:$0xff]
        %v821 = vld [vmem:[%s772 + $0x180] sm:$0xff]
        %v822 = vld [vmem:[%s772 + $0x188] sm:$0xff]
        %v823 = vld [vmem:[%s772 + $0x190] sm:$0xff]
        %v824 = vld [vmem:[%s772 + $0x198] sm:$0xff]
        %v825 = vld [vmem:[%s772 + $0x1a0] sm:$0xff]
        %v826 = vld [vmem:[%s772 + $0x1a8] sm:$0xff]
        %v827 = vld [vmem:[%s772 + $0x1b0] sm:$0xff]
        %v828 = vld [vmem:[%s772 + $0x1b8] sm:$0xff]
        %v829 = vld [vmem:[%s772 + $0x1c0] sm:$0xff]
        %v830 = vld [vmem:[%s772 + $0x1c8] sm:$0xff]
        %v831 = vld [vmem:[%s772 + $0x1d0] sm:$0xff]
        %v832 = vld [vmem:[%s772 + $0x1d8] sm:$0xff]
        %v833 = vld [vmem:[%s772 + $0x1e0] sm:$0xff]
        %v834 = vld [vmem:[%s772 + $0x1e8] sm:$0xff]
        %v835 = vld [vmem:[%s772 + $0x1f0] sm:$0xff]
        %v836 = vld [vmem:[%s772 + $0x1f8] sm:$0xff]
        %v837 = vld [vmem:[%s772 + $0x200] sm:$0xff]
        %v838 = vld [vmem:[%s772 + $0x208] sm:$0xff]
        %v839 = vld [vmem:[%s772 + $0x210] sm:$0xff]
        %v840 = vld [vmem:[%s772 + $0x218] sm:$0xff]
        %v841 = vld [vmem:[%s772 + $0x220] sm:$0xff]
        %v842 = vld [vmem:[%s772 + $0x228] sm:$0xff]
        %v843 = vld [vmem:[%s772 + $0x230] sm:$0xff]
        %v844 = vld [vmem:[%s772 + $0x238] sm:$0xff]
        %vm845 = vsmask.f32 7424
        %v847 = vshrl.u32 %v766, 16
        %v849 = vshll.u32 %v766, 16
        %v851 = vrot.slane %v849, 1
        %v852 = vor.u32 %v847, %v851
        %v854 = vshll.u32 %v769, 16
        %v856 = vrot.slane %v854, 1
        %v857 = vsel %vm845, %v852, %v856
        %v859 = vshrl.u32 %v767, 16
        %v861 = vshll.u32 %v767, 16
        %v863 = vrot.slane %v861, 1
        %v864 = vor.u32 %v859, %v863
        %v866 = vshll.u32 %v770, 16
        %v868 = vrot.slane %v866, 1
        %v869 = vsel %vm845, %v864, %v868
        %v871 = vshrl.u32 %v768, 16
        %v873 = vshll.u32 %v768, 16
        %v875 = vrot.slane %v873, 1
        %v876 = vor.u32 %v871, %v875
        %v878 = vshll.u32 %v771, 16
        %v880 = vrot.slane %v878, 1
        %v881 = vsel %vm845, %v876, %v880
        %v956 = vunpack.c.l.b16 %v773
        %v957 = vunpack.c.h.b16 %v773
        %v958 = vunpack.c.l.b16 %v774
        %v959 = vunpack.c.h.b16 %v774
        %v960 = vunpack.c.l.b16 %v775
        %v961 = vunpack.c.h.b16 %v775
        %v962 = vunpack.c.l.b16 %v776
        %v963 = vunpack.c.h.b16 %v776
        %v964 = vunpack.c.l.b16 %v777
        %v965 = vunpack.c.h.b16 %v777
        %v966 = vunpack.c.l.b16 %v778
        %v967 = vunpack.c.h.b16 %v778
        %v968 = vunpack.c.l.b16 %v779
        %v969 = vunpack.c.h.b16 %v779
        %v970 = vunpack.c.l.b16 %v780
        %v971 = vunpack.c.h.b16 %v780
        %v972 = vunpack.c.l.b16 %v781
        %v973 = vunpack.c.h.b16 %v781
        %v974 = vunpack.c.l.b16 %v782
        %v975 = vunpack.c.h.b16 %v782
        %v976 = vunpack.c.l.b16 %v783
        %v977 = vunpack.c.h.b16 %v783
        %v978 = vunpack.c.l.b16 %v784
        %v979 = vunpack.c.h.b16 %v784
        %v980 = vunpack.c.l.b16 %v785
        %v981 = vunpack.c.h.b16 %v785
        %v982 = vunpack.c.l.b16 %v786
        %v983 = vunpack.c.h.b16 %v786
        %v984 = vunpack.c.l.b16 %v787
        %v985 = vunpack.c.h.b16 %v787
        %v986 = vunpack.c.l.b16 %v788
        %v987 = vunpack.c.h.b16 %v788
        %v988 = vunpack.c.l.b16 %v789
        %v989 = vunpack.c.h.b16 %v789
        %v990 = vunpack.c.l.b16 %v790
        %v991 = vunpack.c.h.b16 %v790
        %v992 = vunpack.c.l.b16 %v791
        %v993 = vunpack.c.h.b16 %v791
        %v994 = vunpack.c.l.b16 %v792
        %v995 = vunpack.c.h.b16 %v792
        %v996 = vunpack.c.l.b16 %v793
        %v997 = vunpack.c.h.b16 %v793
        %v998 = vunpack.c.l.b16 %v794
        %v999 = vunpack.c.h.b16 %v794
        %v1000 = vunpack.c.l.b16 %v795
        %v1001 = vunpack.c.h.b16 %v795
        %v1002 = vunpack.c.l.b16 %v796
        %v1003 = vunpack.c.h.b16 %v796
        %v1004 = vunpack.c.l.b16 %v797
        %v1005 = vunpack.c.h.b16 %v797
        %v1006 = vunpack.c.l.b16 %v798
        %v1007 = vunpack.c.h.b16 %v798
        %v1008 = vunpack.c.l.b16 %v799
        %v1009 = vunpack.c.h.b16 %v799
        %v1010 = vunpack.c.l.b16 %v800
        %v1011 = vunpack.c.h.b16 %v800
        %v1012 = vunpack.c.l.b16 %v801
        %v1013 = vunpack.c.h.b16 %v801
        %v1014 = vunpack.c.l.b16 %v802
        %v1015 = vunpack.c.h.b16 %v802
        %v1016 = vunpack.c.l.b16 %v803
        %v1017 = vunpack.c.h.b16 %v803
        %v1018 = vunpack.c.l.b16 %v804
        %v1019 = vunpack.c.h.b16 %v804
        %v1020 = vunpack.c.l.b16 %v805
        %v1021 = vunpack.c.h.b16 %v805
        %v1022 = vunpack.c.l.b16 %v806
        %v1023 = vunpack.c.h.b16 %v806
        %v1024 = vunpack.c.l.b16 %v807
        %v1025 = vunpack.c.h.b16 %v807
        %v1026 = vunpack.c.l.b16 %v808
        %v1027 = vunpack.c.h.b16 %v808
        %v1028 = vunpack.c.l.b16 %v809
        %v1029 = vunpack.c.h.b16 %v809
        %v1030 = vunpack.c.l.b16 %v810
        %v1031 = vunpack.c.h.b16 %v810
        %v1032 = vunpack.c.l.b16 %v811
        %v1033 = vunpack.c.h.b16 %v811
        %v1034 = vunpack.c.l.b16 %v812
        %v1035 = vunpack.c.h.b16 %v812
        %v1036 = vunpack.c.l.b16 %v813
        %v1037 = vunpack.c.h.b16 %v813
        %v1038 = vunpack.c.l.b16 %v814
        %v1039 = vunpack.c.h.b16 %v814
        %v1040 = vunpack.c.l.b16 %v815
        %v1041 = vunpack.c.h.b16 %v815
        %v1042 = vunpack.c.l.b16 %v816
        %v1043 = vunpack.c.h.b16 %v816
        %v1044 = vunpack.c.l.b16 %v817
        %v1045 = vunpack.c.h.b16 %v817
        %v1046 = vunpack.c.l.b16 %v818
        %v1047 = vunpack.c.h.b16 %v818
        %v1048 = vunpack.c.l.b16 %v819
        %v1049 = vunpack.c.h.b16 %v819
        %v1050 = vunpack.c.l.b16 %v820
        %v1051 = vunpack.c.h.b16 %v820
        %v1052 = vunpack.c.l.b16 %v821
        %v1053 = vunpack.c.h.b16 %v821
        %v1054 = vunpack.c.l.b16 %v822
        %v1055 = vunpack.c.h.b16 %v822
        %v1056 = vunpack.c.l.b16 %v823
        %v1057 = vunpack.c.h.b16 %v823
        %v1058 = vunpack.c.l.b16 %v824
        %v1059 = vunpack.c.h.b16 %v824
        %v1060 = vunpack.c.l.b16 %v825
        %v1061 = vunpack.c.h.b16 %v825
        %v1062 = vunpack.c.l.b16 %v826
        %v1063 = vunpack.c.h.b16 %v826
        %v1064 = vunpack.c.l.b16 %v827
        %v1065 = vunpack.c.h.b16 %v827
        %v1066 = vunpack.c.l.b16 %v828
        %v1067 = vunpack.c.h.b16 %v828
        %v1068 = vunpack.c.l.b16 %v829
        %v1069 = vunpack.c.h.b16 %v829
        %v1070 = vunpack.c.l.b16 %v830
        %v1071 = vunpack.c.h.b16 %v830
        %v1072 = vunpack.c.l.b16 %v831
        %v1073 = vunpack.c.h.b16 %v831
        %v1074 = vunpack.c.l.b16 %v832
        %v1075 = vunpack.c.h.b16 %v832
        %v1076 = vunpack.c.l.b16 %v833
        %v1077 = vunpack.c.h.b16 %v833
        %v1078 = vunpack.c.l.b16 %v834
        %v1079 = vunpack.c.h.b16 %v834
        %v1080 = vunpack.c.l.b16 %v835
        %v1081 = vunpack.c.h.b16 %v835
        %v1082 = vunpack.c.l.b16 %v836
        %v1083 = vunpack.c.h.b16 %v836
        %v1084 = vunpack.c.l.b16 %v837
        %v1085 = vunpack.c.h.b16 %v837
        %v1086 = vunpack.c.l.b16 %v838
        %v1087 = vunpack.c.h.b16 %v838
        %v1088 = vunpack.c.l.b16 %v839
        %v1089 = vunpack.c.h.b16 %v839
        %v1090 = vunpack.c.l.b16 %v840
        %v1091 = vunpack.c.h.b16 %v840
        %v1092 = vunpack.c.l.b16 %v841
        %v1093 = vunpack.c.h.b16 %v841
        %v1094 = vunpack.c.l.b16 %v842
        %v1095 = vunpack.c.h.b16 %v842
        %v1096 = vunpack.c.l.b16 %v843
        %v1097 = vunpack.c.h.b16 %v843
        %v1098 = vunpack.c.l.b16 %v844
        %v1099 = vunpack.c.h.b16 %v844
        %v1100 = vpack.c.b16 %v960, %v956
        %v1101 = vpack.c.b16 %v961, %v957
        %v1102 = vpack.c.b16 %v962, %v958
        %v1103 = vpack.c.b16 %v963, %v959
        %v1104 = vpack.c.b16 %v968, %v964
        %v1105 = vpack.c.b16 %v969, %v965
        %v1106 = vpack.c.b16 %v970, %v966
        %v1107 = vpack.c.b16 %v971, %v967
        %v1108 = vpack.c.b16 %v976, %v972
        %v1109 = vpack.c.b16 %v977, %v973
        %v1110 = vpack.c.b16 %v978, %v974
        %v1111 = vpack.c.b16 %v979, %v975
        %v1112 = vpack.c.b16 %v984, %v980
        %v1113 = vpack.c.b16 %v985, %v981
        %v1114 = vpack.c.b16 %v986, %v982
        %v1115 = vpack.c.b16 %v987, %v983
        %v1116 = vpack.c.b16 %v992, %v988
        %v1117 = vpack.c.b16 %v993, %v989
        %v1118 = vpack.c.b16 %v994, %v990
        %v1119 = vpack.c.b16 %v995, %v991
        %v1120 = vpack.c.b16 %v1000, %v996
        %v1121 = vpack.c.b16 %v1001, %v997
        %v1122 = vpack.c.b16 %v1002, %v998
        %v1123 = vpack.c.b16 %v1003, %v999
        %v1124 = vpack.c.b16 %v1008, %v1004
        %v1125 = vpack.c.b16 %v1009, %v1005
        %v1126 = vpack.c.b16 %v1010, %v1006
        %v1127 = vpack.c.b16 %v1011, %v1007
        %v1128 = vpack.c.b16 %v1016, %v1012
        %v1129 = vpack.c.b16 %v1017, %v1013
        %v1130 = vpack.c.b16 %v1018, %v1014
        %v1131 = vpack.c.b16 %v1019, %v1015
        %v1132 = vpack.c.b16 %v1024, %v1020
        %v1133 = vpack.c.b16 %v1025, %v1021
        %v1134 = vpack.c.b16 %v1026, %v1022
        %v1135 = vpack.c.b16 %v1027, %v1023
        %v1136 = vpack.c.b16 %v1032, %v1028
        %v1137 = vpack.c.b16 %v1033, %v1029
        %v1138 = vpack.c.b16 %v1034, %v1030
        %v1139 = vpack.c.b16 %v1035, %v1031
        %v1140 = vpack.c.b16 %v1040, %v1036
        %v1141 = vpack.c.b16 %v1041, %v1037
        %v1142 = vpack.c.b16 %v1042, %v1038
        %v1143 = vpack.c.b16 %v1043, %v1039
        %v1144 = vpack.c.b16 %v1048, %v1044
        %v1145 = vpack.c.b16 %v1049, %v1045
        %v1146 = vpack.c.b16 %v1050, %v1046
        %v1147 = vpack.c.b16 %v1051, %v1047
        %v1148 = vpack.c.b16 %v1056, %v1052
        %v1149 = vpack.c.b16 %v1057, %v1053
        %v1150 = vpack.c.b16 %v1058, %v1054
        %v1151 = vpack.c.b16 %v1059, %v1055
        %v1152 = vpack.c.b16 %v1064, %v1060
        %v1153 = vpack.c.b16 %v1065, %v1061
        %v1154 = vpack.c.b16 %v1066, %v1062
        %v1155 = vpack.c.b16 %v1067, %v1063
        %v1156 = vpack.c.b16 %v1072, %v1068
        %v1157 = vpack.c.b16 %v1073, %v1069
        %v1158 = vpack.c.b16 %v1074, %v1070
        %v1159 = vpack.c.b16 %v1075, %v1071
        %v1160 = vpack.c.b16 %v1080, %v1076
        %v1161 = vpack.c.b16 %v1081, %v1077
        %v1162 = vpack.c.b16 %v1082, %v1078
        %v1163 = vpack.c.b16 %v1083, %v1079
        %v1164 = vpack.c.b16 %v1088, %v1084
        %v1165 = vpack.c.b16 %v1089, %v1085
        %v1166 = vpack.c.b16 %v1090, %v1086
        %v1167 = vpack.c.b16 %v1091, %v1087
        %v1168 = vpack.c.b16 %v1096, %v1092
        %v1169 = vpack.c.b16 %v1097, %v1093
        %v1170 = vpack.c.b16 %v1098, %v1094
        %v1171 = vpack.c.b16 %v1099, %v1095
        %vm1244 = vcmask 261120
        %v1246 = vsel %vm1244, %v881, 0
        %1248 = vmatprep.subr.bf16.mxu0 %v1101
        %1249 = vmatpush1.bf16.msra.mxu0 %v1100
        %1250 = vmatprep.subr.bf16.mxu0 %v1105
        %1251 = vmatpush1.bf16.msra.mxu0 %v1104
        %1252 = vmatprep.subr.bf16.mxu0 %v1109
        %1253 = vmatpush1.bf16.msra.mxu0 %v1108
        %1254 = vmatprep.subr.bf16.mxu0 %v1113
        %1255 = vmatpush1.bf16.msra.mxu0 %v1112
        %1256 = vmatprep.subr.bf16.mxu0 %v1117
        %1257 = vmatpush1.bf16.msra.mxu0 %v1116
        %1258 = vmatprep.subr.bf16.mxu0 %v1121
        %1259 = vmatpush1.bf16.msra.mxu0 %v1120
        %1260 = vmatprep.subr.bf16.mxu0 %v1125
        %1261 = vmatpush1.bf16.msra.mxu0 %v1124
        %1262 = vmatprep.subr.bf16.mxu0 %v1129
        %1263 = vmatpush1.bf16.msra.mxu0 %v1128
        %1264 = vmatprep.subr.bf16.mxu0 %v1133
        %1265 = vmatpush1.bf16.msra.mxu0 %v1132
        %1266 = vmatprep.subr.bf16.mxu0 %v1137
        %1267 = vmatpush1.bf16.msra.mxu0 %v1136
        %1268 = vmatprep.subr.bf16.mxu0 %v1141
        %1269 = vmatpush1.bf16.msra.mxu0 %v1140
        %1270 = vmatprep.subr.bf16.mxu0 %v1145
        %1271 = vmatpush1.bf16.msra.mxu0 %v1144
        %1272 = vmatprep.subr.bf16.mxu0 %v1149
        %1273 = vmatpush1.bf16.msra.mxu0 %v1148
        %1274 = vmatprep.subr.bf16.mxu0 %v1153
        %1275 = vmatpush1.bf16.msra.mxu0 %v1152
        %1276 = vmatprep.subr.bf16.mxu0 %v1157
        %1277 = vmatpush1.bf16.msra.mxu0 %v1156
        %1278 = vmatprep.subr.bf16.mxu0 %v1161
        %1279 = vmatpush1.bf16.msra.mxu0 %v1160
        %1280 = vmatprep.mubr.bf16.mxu0 %v869
        %1281 = vmatmul.mubr.bf16.gmra.mrb[0].mxu0 %v857
        %v1282 = vpop.f32.mrb[0].mxu0
        %v1283 = vadd.f32 0.0, %v1282
        %v1284 = vpop.f32.mrb[0].mxu0
        %v1285 = vadd.f32 0.0, %v1284
        %v1286 = vpop.f32.mrb[0].mxu0
        %v1287 = vadd.f32 0.0, %v1286
        %v1288 = vpop.f32.mrb[0].mxu0
        %v1289 = vadd.f32 0.0, %v1288
        %1290 = vdwg.mxu0
        %1291 = vmatprep.subr.bf16.mxu0 %v1165
        %1292 = vmatpush1.bf16.msra.mxu0 %v1164
        %1293 = vmatprep.subr.bf16.mxu0 %v1169
        %1294 = vmatpush1.bf16.msra.mxu0 %v1168
        %1295 = vmatprep.subr.bf16.mxu0 0
        %1296 = vmatpush1.bf16.msra.mxu0 0
        %1297 = vmatprep.subr.bf16.mxu0 0
        %1298 = vmatpush1.bf16.msra.mxu0 0
        %1299 = vmatprep.subr.bf16.mxu0 0
        %1300 = vmatpush1.bf16.msra.mxu0 0
        %1301 = vmatprep.subr.bf16.mxu0 0
        %1302 = vmatpush1.bf16.msra.mxu0 0
        %1303 = vmatprep.subr.bf16.mxu0 0
        %1304 = vmatpush1.bf16.msra.mxu0 0
        %1305 = vmatprep.subr.bf16.mxu0 0
        %1306 = vmatpush1.bf16.msra.mxu0 0
        %1307 = vmatprep.subr.bf16.mxu0 0
        %1308 = vmatpush1.bf16.msra.mxu0 0
        %1309 = vmatprep.subr.bf16.mxu0 0
        %1310 = vmatpush1.bf16.msra.mxu0 0
        %1311 = vmatprep.subr.bf16.mxu0 0
        %1312 = vmatpush1.bf16.msra.mxu0 0
        %1313 = vmatprep.subr.bf16.mxu0 0
        %1314 = vmatpush1.bf16.msra.mxu0 0
        %1315 = vmatprep.subr.bf16.mxu0 0
        %1316 = vmatpush1.bf16.msra.mxu0 0
        %1317 = vmatprep.subr.bf16.mxu0 0
        %1318 = vmatpush1.bf16.msra.mxu0 0
        %1319 = vmatprep.subr.bf16.mxu0 0
        %1320 = vmatpush1.bf16.msra.mxu0 0
        %1321 = vmatprep.subr.bf16.mxu0 0
        %1322 = vmatpush1.bf16.msra.mxu0 0
        %1323 = vmatprep.mubr.bf16.mxu0 0
        %1324 = vmatmul.mubr.bf16.gmra.mrb[0].mxu0 %v1246
        %v1325 = vpop.f32.mrb[0].mxu0
        %v1326 = vadd.f32 %v1283, %v1325
        %v1327 = vpop.f32.mrb[0].mxu0
        %v1328 = vadd.f32 %v1285, %v1327
        %v1329 = vpop.f32.mrb[0].mxu0
        %v1330 = vadd.f32 %v1287, %v1329
        %v1331 = vpop.f32.mrb[0].mxu0
        %v1332 = vadd.f32 %v1289, %v1331
        %1333 = vdwg.mxu0
        %1334 = vmatprep.subr.bf16.mxu0 %v1103
        %1335 = vmatpush1.bf16.msra.mxu0 %v1102
        %1336 = vmatprep.subr.bf16.mxu0 %v1107
        %1337 = vmatpush1.bf16.msra.mxu0 %v1106
        %1338 = vmatprep.subr.bf16.mxu0 %v1111
        %1339 = vmatpush1.bf16.msra.mxu0 %v1110
        %1340 = vmatprep.subr.bf16.mxu0 %v1115
        %1341 = vmatpush1.bf16.msra.mxu0 %v1114
        %1342 = vmatprep.subr.bf16.mxu0 %v1119
        %1343 = vmatpush1.bf16.msra.mxu0 %v1118
        %1344 = vmatprep.subr.bf16.mxu0 %v1123
        %1345 = vmatpush1.bf16.msra.mxu0 %v1122
        %1346 = vmatprep.subr.bf16.mxu0 %v1127
        %1347 = vmatpush1.bf16.msra.mxu0 %v1126
        %1348 = vmatprep.subr.bf16.mxu0 %v1131
        %1349 = vmatpush1.bf16.msra.mxu0 %v1130
        %1350 = vmatprep.subr.bf16.mxu0 %v1135
        %1351 = vmatpush1.bf16.msra.mxu0 %v1134
        %1352 = vmatprep.subr.bf16.mxu0 %v1139
        %1353 = vmatpush1.bf16.msra.mxu0 %v1138
        %1354 = vmatprep.subr.bf16.mxu0 %v1143
        %1355 = vmatpush1.bf16.msra.mxu0 %v1142
        %1356 = vmatprep.subr.bf16.mxu0 %v1147
        %1357 = vmatpush1.bf16.msra.mxu0 %v1146
        %1358 = vmatprep.subr.bf16.mxu0 %v1151
        %1359 = vmatpush1.bf16.msra.mxu0 %v1150
        %1360 = vmatprep.subr.bf16.mxu0 %v1155
        %1361 = vmatpush1.bf16.msra.mxu0 %v1154
        %1362 = vmatprep.subr.bf16.mxu0 %v1159
        %1363 = vmatpush1.bf16.msra.mxu0 %v1158
        %1364 = vmatprep.subr.bf16.mxu0 %v1163
        %1365 = vmatpush1.bf16.msra.mxu0 %v1162
        %1366 = vmatprep.mubr.bf16.mxu0 %v869
        %1367 = vmatmul.mubr.bf16.gmra.mrb[0].mxu0 %v857
        %v1368 = vpop.f32.mrb[0].mxu0
        %v1369 = vadd.f32 0.0, %v1368
        %v1370 = vpop.f32.mrb[0].mxu0
        %v1371 = vadd.f32 0.0, %v1370
        %v1372 = vpop.f32.mrb[0].mxu0
        %v1373 = vadd.f32 0.0, %v1372
        %v1374 = vpop.f32.mrb[0].mxu0
        %v1375 = vadd.f32 0.0, %v1374
        %1376 = vdwg.mxu0
        %1377 = vmatprep.subr.bf16.mxu0 %v1167
        %1378 = vmatpush1.bf16.msra.mxu0 %v1166
        %1379 = vmatprep.subr.bf16.mxu0 %v1171
        %1380 = vmatpush1.bf16.msra.mxu0 %v1170
        %1381 = vmatprep.subr.bf16.mxu0 0
        %1382 = vmatpush1.bf16.msra.mxu0 0
        %1383 = vmatprep.subr.bf16.mxu0 0
        %1384 = vmatpush1.bf16.msra.mxu0 0
        %1385 = vmatprep.subr.bf16.mxu0 0
        %1386 = vmatpush1.bf16.msra.mxu0 0
        %1387 = vmatprep.subr.bf16.mxu0 0
        %1388 = vmatpush1.bf16.msra.mxu0 0
        %1389 = vmatprep.subr.bf16.mxu0 0
        %1390 = vmatpush1.bf16.msra.mxu0 0
        %1391 = vmatprep.subr.bf16.mxu0 0
        %1392 = vmatpush1.bf16.msra.mxu0 0
        %1393 = vmatprep.subr.bf16.mxu0 0
        %1394 = vmatpush1.bf16.msra.mxu0 0
        %1395 = vmatprep.subr.bf16.mxu0 0
        %1396 = vmatpush1.bf16.msra.mxu0 0
        %1397 = vmatprep.subr.bf16.mxu0 0
        %1398 = vmatpush1.bf16.msra.mxu0 0
        %1399 = vmatprep.subr.bf16.mxu0 0
        %1400 = vmatpush1.bf16.msra.mxu0 0
        %1401 = vmatprep.subr.bf16.mxu0 0
        %1402 = vmatpush1.bf16.msra.mxu0 0
        %1403 = vmatprep.subr.bf16.mxu0 0
        %1404 = vmatpush1.bf16.msra.mxu0 0
        %1405 = vmatprep.subr.bf16.mxu0 0
        %1406 = vmatpush1.bf16.msra.mxu0 0
        %1407 = vmatprep.subr.bf16.mxu0 0
        %1408 = vmatpush1.bf16.msra.mxu0 0
        %1409 = vmatprep.mubr.bf16.mxu0 0
        %1410 = vmatmul.mubr.bf16.gmra.mrb[0].mxu0 %v1246
        %v1411 = vpop.f32.mrb[0].mxu0
        %v1412 = vadd.f32 %v1369, %v1411
        %v1413 = vpop.f32.mrb[0].mxu0
        %v1414 = vadd.f32 %v1371, %v1413
        %v1415 = vpop.f32.mrb[0].mxu0
        %v1416 = vadd.f32 %v1373, %v1415
        %v1417 = vpop.f32.mrb[0].mxu0
        %v1418 = vadd.f32 %v1375, %v1417
        %1419 = vdwg.mxu0
        %v1492 = vunpack.c.l.b16 %v688
        %v1493 = vunpack.c.h.b16 %v688
        %v1494 = vunpack.c.l.b16 %v689
        %v1495 = vunpack.c.h.b16 %v689
        %v1496 = vunpack.c.l.b16 %v690
        %v1497 = vunpack.c.h.b16 %v690
        %v1498 = vunpack.c.l.b16 %v691
        %v1499 = vunpack.c.h.b16 %v691
        %v1500 = vunpack.c.l.b16 %v692
        %v1501 = vunpack.c.h.b16 %v692
        %v1502 = vunpack.c.l.b16 %v693
        %v1503 = vunpack.c.h.b16 %v693
        %v1504 = vunpack.c.l.b16 %v694
        %v1505 = vunpack.c.h.b16 %v694
        %v1506 = vunpack.c.l.b16 %v695
        %v1507 = vunpack.c.h.b16 %v695
        %v1508 = vunpack.c.l.b16 %v696
        %v1509 = vunpack.c.h.b16 %v696
        %v1510 = vunpack.c.l.b16 %v697
        %v1511 = vunpack.c.h.b16 %v697
        %v1512 = vunpack.c.l.b16 %v698
        %v1513 = vunpack.c.h.b16 %v698
        %v1514 = vunpack.c.l.b16 %v699
        %v1515 = vunpack.c.h.b16 %v699
        %v1516 = vunpack.c.l.b16 %v700
        %v1517 = vunpack.c.h.b16 %v700
        %v1518 = vunpack.c.l.b16 %v701
        %v1519 = vunpack.c.h.b16 %v701
        %v1520 = vunpack.c.l.b16 %v702
        %v1521 = vunpack.c.h.b16 %v702
        %v1522 = vunpack.c.l.b16 %v703
        %v1523 = vunpack.c.h.b16 %v703
        %v1524 = vunpack.c.l.b16 %v704
        %v1525 = vunpack.c.h.b16 %v704
        %v1526 = vunpack.c.l.b16 %v705
        %v1527 = vunpack.c.h.b16 %v705
        %v1528 = vunpack.c.l.b16 %v706
        %v1529 = vunpack.c.h.b16 %v706
        %v1530 = vunpack.c.l.b16 %v707
        %v1531 = vunpack.c.h.b16 %v707
        %v1532 = vunpack.c.l.b16 %v708
        %v1533 = vunpack.c.h.b16 %v708
        %v1534 = vunpack.c.l.b16 %v709
        %v1535 = vunpack.c.h.b16 %v709
        %v1536 = vunpack.c.l.b16 %v710
        %v1537 = vunpack.c.h.b16 %v710
        %v1538 = vunpack.c.l.b16 %v711
        %v1539 = vunpack.c.h.b16 %v711
        %v1540 = vunpack.c.l.b16 %v712
        %v1541 = vunpack.c.h.b16 %v712
        %v1542 = vunpack.c.l.b16 %v713
        %v1543 = vunpack.c.h.b16 %v713
        %v1544 = vunpack.c.l.b16 %v714
        %v1545 = vunpack.c.h.b16 %v714
        %v1546 = vunpack.c.l.b16 %v715
        %v1547 = vunpack.c.h.b16 %v715
        %v1548 = vunpack.c.l.b16 %v716
        %v1549 = vunpack.c.h.b16 %v716
        %v1550 = vunpack.c.l.b16 %v717
        %v1551 = vunpack.c.h.b16 %v717
        %v1552 = vunpack.c.l.b16 %v718
        %v1553 = vunpack.c.h.b16 %v718
        %v1554 = vunpack.c.l.b16 %v719
        %v1555 = vunpack.c.h.b16 %v719
        %v1556 = vunpack.c.l.b16 %v720
        %v1557 = vunpack.c.h.b16 %v720
        %v1558 = vunpack.c.l.b16 %v721
        %v1559 = vunpack.c.h.b16 %v721
        %v1560 = vunpack.c.l.b16 %v722
        %v1561 = vunpack.c.h.b16 %v722
        %v1562 = vunpack.c.l.b16 %v723
        %v1563 = vunpack.c.h.b16 %v723
        %v1564 = vunpack.c.l.b16 %v724
        %v1565 = vunpack.c.h.b16 %v724
        %v1566 = vunpack.c.l.b16 %v725
        %v1567 = vunpack.c.h.b16 %v725
        %v1568 = vunpack.c.l.b16 %v726
        %v1569 = vunpack.c.h.b16 %v726
        %v1570 = vunpack.c.l.b16 %v727
        %v1571 = vunpack.c.h.b16 %v727
        %v1572 = vunpack.c.l.b16 %v728
        %v1573 = vunpack.c.h.b16 %v728
        %v1574 = vunpack.c.l.b16 %v729
        %v1575 = vunpack.c.h.b16 %v729
        %v1576 = vunpack.c.l.b16 %v730
        %v1577 = vunpack.c.h.b16 %v730
        %v1578 = vunpack.c.l.b16 %v731
        %v1579 = vunpack.c.h.b16 %v731
        %v1580 = vunpack.c.l.b16 %v732
        %v1581 = vunpack.c.h.b16 %v732
        %v1582 = vunpack.c.l.b16 %v733
        %v1583 = vunpack.c.h.b16 %v733
        %v1584 = vunpack.c.l.b16 %v734
        %v1585 = vunpack.c.h.b16 %v734
        %v1586 = vunpack.c.l.b16 %v735
        %v1587 = vunpack.c.h.b16 %v735
        %v1588 = vunpack.c.l.b16 %v736
        %v1589 = vunpack.c.h.b16 %v736
        %v1590 = vunpack.c.l.b16 %v737
        %v1591 = vunpack.c.h.b16 %v737
        %v1592 = vunpack.c.l.b16 %v738
        %v1593 = vunpack.c.h.b16 %v738
        %v1594 = vunpack.c.l.b16 %v739
        %v1595 = vunpack.c.h.b16 %v739
        %v1596 = vunpack.c.l.b16 %v740
        %v1597 = vunpack.c.h.b16 %v740
        %v1598 = vunpack.c.l.b16 %v741
        %v1599 = vunpack.c.h.b16 %v741
        %v1600 = vunpack.c.l.b16 %v742
        %v1601 = vunpack.c.h.b16 %v742
        %v1602 = vunpack.c.l.b16 %v743
        %v1603 = vunpack.c.h.b16 %v743
        %v1604 = vunpack.c.l.b16 %v744
        %v1605 = vunpack.c.h.b16 %v744
        %v1606 = vunpack.c.l.b16 %v745
        %v1607 = vunpack.c.h.b16 %v745
        %v1608 = vunpack.c.l.b16 %v746
        %v1609 = vunpack.c.h.b16 %v746
        %v1610 = vunpack.c.l.b16 %v747
        %v1611 = vunpack.c.h.b16 %v747
        %v1612 = vunpack.c.l.b16 %v748
        %v1613 = vunpack.c.h.b16 %v748
        %v1614 = vunpack.c.l.b16 %v749
        %v1615 = vunpack.c.h.b16 %v749
        %v1616 = vunpack.c.l.b16 %v750
        %v1617 = vunpack.c.h.b16 %v750
        %v1618 = vunpack.c.l.b16 %v751
        %v1619 = vunpack.c.h.b16 %v751
        %v1620 = vunpack.c.l.b16 %v752
        %v1621 = vunpack.c.h.b16 %v752
        %v1622 = vunpack.c.l.b16 %v753
        %v1623 = vunpack.c.h.b16 %v753
        %v1624 = vunpack.c.l.b16 %v754
        %v1625 = vunpack.c.h.b16 %v754
        %v1626 = vunpack.c.l.b16 %v755
        %v1627 = vunpack.c.h.b16 %v755
        %v1628 = vunpack.c.l.b16 %v756
        %v1629 = vunpack.c.h.b16 %v756
        %v1630 = vunpack.c.l.b16 %v757
        %v1631 = vunpack.c.h.b16 %v757
        %v1632 = vunpack.c.l.b16 %v758
        %v1633 = vunpack.c.h.b16 %v758
        %v1634 = vunpack.c.l.b16 %v759
        %v1635 = vunpack.c.h.b16 %v759
        %v1636 = vpack.c.b16 %v1496, %v1492
        %v1637 = vpack.c.b16 %v1497, %v1493
        %v1638 = vpack.c.b16 %v1498, %v1494
        %v1639 = vpack.c.b16 %v1499, %v1495
        %v1640 = vpack.c.b16 %v1504, %v1500
        %v1641 = vpack.c.b16 %v1505, %v1501
        %v1642 = vpack.c.b16 %v1506, %v1502
        %v1643 = vpack.c.b16 %v1507, %v1503
        %v1644 = vpack.c.b16 %v1512, %v1508
        %v1645 = vpack.c.b16 %v1513, %v1509
        %v1646 = vpack.c.b16 %v1514, %v1510
        %v1647 = vpack.c.b16 %v1515, %v1511
        %v1648 = vpack.c.b16 %v1520, %v1516
        %v1649 = vpack.c.b16 %v1521, %v1517
        %v1650 = vpack.c.b16 %v1522, %v1518
        %v1651 = vpack.c.b16 %v1523, %v1519
        %v1652 = vpack.c.b16 %v1528, %v1524
        %v1653 = vpack.c.b16 %v1529, %v1525
        %v1654 = vpack.c.b16 %v1530, %v1526
        %v1655 = vpack.c.b16 %v1531, %v1527
        %v1656 = vpack.c.b16 %v1536, %v1532
        %v1657 = vpack.c.b16 %v1537, %v1533
        %v1658 = vpack.c.b16 %v1538, %v1534
        %v1659 = vpack.c.b16 %v1539, %v1535
        %v1660 = vpack.c.b16 %v1544, %v1540
        %v1661 = vpack.c.b16 %v1545, %v1541
        %v1662 = vpack.c.b16 %v1546, %v1542
        %v1663 = vpack.c.b16 %v1547, %v1543
        %v1664 = vpack.c.b16 %v1552, %v1548
        %v1665 = vpack.c.b16 %v1553, %v1549
        %v1666 = vpack.c.b16 %v1554, %v1550
        %v1667 = vpack.c.b16 %v1555, %v1551
        %v1668 = vpack.c.b16 %v1560, %v1556
        %v1669 = vpack.c.b16 %v1561, %v1557
        %v1670 = vpack.c.b16 %v1562, %v1558
        %v1671 = vpack.c.b16 %v1563, %v1559
        %v1672 = vpack.c.b16 %v1568, %v1564
        %v1673 = vpack.c.b16 %v1569, %v1565
        %v1674 = vpack.c.b16 %v1570, %v1566
        %v1675 = vpack.c.b16 %v1571, %v1567
        %v1676 = vpack.c.b16 %v1576, %v1572
        %v1677 = vpack.c.b16 %v1577, %v1573
        %v1678 = vpack.c.b16 %v1578, %v1574
        %v1679 = vpack.c.b16 %v1579, %v1575
        %v1680 = vpack.c.b16 %v1584, %v1580
        %v1681 = vpack.c.b16 %v1585, %v1581
        %v1682 = vpack.c.b16 %v1586, %v1582
        %v1683 = vpack.c.b16 %v1587, %v1583
        %v1684 = vpack.c.b16 %v1592, %v1588
        %v1685 = vpack.c.b16 %v1593, %v1589
        %v1686 = vpack.c.b16 %v1594, %v1590
        %v1687 = vpack.c.b16 %v1595, %v1591
        %v1688 = vpack.c.b16 %v1600, %v1596
        %v1689 = vpack.c.b16 %v1601, %v1597
        %v1690 = vpack.c.b16 %v1602, %v1598
        %v1691 = vpack.c.b16 %v1603, %v1599
        %v1692 = vpack.c.b16 %v1608, %v1604
        %v1693 = vpack.c.b16 %v1609, %v1605
        %v1694 = vpack.c.b16 %v1610, %v1606
        %v1695 = vpack.c.b16 %v1611, %v1607
        %v1696 = vpack.c.b16 %v1616, %v1612
        %v1697 = vpack.c.b16 %v1617, %v1613
        %v1698 = vpack.c.b16 %v1618, %v1614
        %v1699 = vpack.c.b16 %v1619, %v1615
        %v1700 = vpack.c.b16 %v1624, %v1620
        %v1701 = vpack.c.b16 %v1625, %v1621
        %v1702 = vpack.c.b16 %v1626, %v1622
        %v1703 = vpack.c.b16 %v1627, %v1623
        %v1704 = vpack.c.b16 %v1632, %v1628
        %v1705 = vpack.c.b16 %v1633, %v1629
        %v1706 = vpack.c.b16 %v1634, %v1630
        %v1707 = vpack.c.b16 %v1635, %v1631
        %v1781 = vsel %vm1244, %v687, 0
        %1783 = vmatprep.subr.bf16.mxu0 %v1637
        %1784 = vmatpush1.bf16.msra.mxu0 %v1636
        %1785 = vmatprep.subr.bf16.mxu0 %v1641
        %1786 = vmatpush1.bf16.msra.mxu0 %v1640
        %1787 = vmatprep.subr.bf16.mxu0 %v1645
        %1788 = vmatpush1.bf16.msra.mxu0 %v1644
        %1789 = vmatprep.subr.bf16.mxu0 %v1649
        %1790 = vmatpush1.bf16.msra.mxu0 %v1648
        %1791 = vmatprep.subr.bf16.mxu0 %v1653
        %1792 = vmatpush1.bf16.msra.mxu0 %v1652
        %1793 = vmatprep.subr.bf16.mxu0 %v1657
        %1794 = vmatpush1.bf16.msra.mxu0 %v1656
        %1795 = vmatprep.subr.bf16.mxu0 %v1661
        %1796 = vmatpush1.bf16.msra.mxu0 %v1660
        %1797 = vmatprep.subr.bf16.mxu0 %v1665
        %1798 = vmatpush1.bf16.msra.mxu0 %v1664
        %1799 = vmatprep.subr.bf16.mxu0 %v1669
        %1800 = vmatpush1.bf16.msra.mxu0 %v1668
        %1801 = vmatprep.subr.bf16.mxu0 %v1673
        %1802 = vmatpush1.bf16.msra.mxu0 %v1672
        %1803 = vmatprep.subr.bf16.mxu0 %v1677
        %1804 = vmatpush1.bf16.msra.mxu0 %v1676
        %1805 = vmatprep.subr.bf16.mxu0 %v1681
        %1806 = vmatpush1.bf16.msra.mxu0 %v1680
        %1807 = vmatprep.subr.bf16.mxu0 %v1685
        %1808 = vmatpush1.bf16.msra.mxu0 %v1684
        %1809 = vmatprep.subr.bf16.mxu0 %v1689
        %1810 = vmatpush1.bf16.msra.mxu0 %v1688
        %1811 = vmatprep.subr.bf16.mxu0 %v1693
        %1812 = vmatpush1.bf16.msra.mxu0 %v1692
        %1813 = vmatprep.subr.bf16.mxu0 %v1697
        %1814 = vmatpush1.bf16.msra.mxu0 %v1696
        %1815 = vmatprep.mubr.bf16.mxu0 %v686
        %1816 = vmatmul.mubr.bf16.gmra.mrb[0].mxu0 %v685
        %v1817 = vpop.f32.mrb[0].mxu0
        %v1818 = vadd.f32 %v1326, %v1817
        %v1819 = vpop.f32.mrb[0].mxu0
        %v1820 = vadd.f32 %v1328, %v1819
        %v1821 = vpop.f32.mrb[0].mxu0
        %v1822 = vadd.f32 %v1330, %v1821
        %v1823 = vpop.f32.mrb[0].mxu0
        %v1824 = vadd.f32 %v1332, %v1823
        %1825 = vdwg.mxu0
        %1826 = vmatprep.subr.bf16.mxu0 %v1701
        %1827 = vmatpush1.bf16.msra.mxu0 %v1700
        %1828 = vmatprep.subr.bf16.mxu0 %v1705
        %1829 = vmatpush1.bf16.msra.mxu0 %v1704
        %1830 = vmatprep.subr.bf16.mxu0 0
        %1831 = vmatpush1.bf16.msra.mxu0 0
        %1832 = vmatprep.subr.bf16.mxu0 0
        %1833 = vmatpush1.bf16.msra.mxu0 0
        %1834 = vmatprep.subr.bf16.mxu0 0
        %1835 = vmatpush1.bf16.msra.mxu0 0
        %1836 = vmatprep.subr.bf16.mxu0 0
        %1837 = vmatpush1.bf16.msra.mxu0 0
        %1838 = vmatprep.subr.bf16.mxu0 0
        %1839 = vmatpush1.bf16.msra.mxu0 0
        %1840 = vmatprep.subr.bf16.mxu0 0
        %1841 = vmatpush1.bf16.msra.mxu0 0
        %1842 = vmatprep.subr.bf16.mxu0 0
        %1843 = vmatpush1.bf16.msra.mxu0 0
        %1844 = vmatprep.subr.bf16.mxu0 0
        %1845 = vmatpush1.bf16.msra.mxu0 0
        %1846 = vmatprep.subr.bf16.mxu0 0
        %1847 = vmatpush1.bf16.msra.mxu0 0
        %1848 = vmatprep.subr.bf16.mxu0 0
        %1849 = vmatpush1.bf16.msra.mxu0 0
        %1850 = vmatprep.subr.bf16.mxu0 0
        %1851 = vmatpush1.bf16.msra.mxu0 0
        %1852 = vmatprep.subr.bf16.mxu0 0
        %1853 = vmatpush1.bf16.msra.mxu0 0
        %1854 = vmatprep.subr.bf16.mxu0 0
        %1855 = vmatpush1.bf16.msra.mxu0 0
        %1856 = vmatprep.subr.bf16.mxu0 0
        %1857 = vmatpush1.bf16.msra.mxu0 0
        %1858 = vmatprep.mubr.bf16.mxu0 0
        %1859 = vmatmul.mubr.bf16.gmra.mrb[0].mxu0 %v1781
        %v1860 = vpop.f32.mrb[0].mxu0
        %v1861 = vadd.f32 %v1818, %v1860
        %v1862 = vpop.f32.mrb[0].mxu0
        %v1863 = vadd.f32 %v1820, %v1862
        %v1864 = vpop.f32.mrb[0].mxu0
        %v1865 = vadd.f32 %v1822, %v1864
        %v1866 = vpop.f32.mrb[0].mxu0
        %v1867 = vadd.f32 %v1824, %v1866
        %1868 = vdwg.mxu0
        %1869 = vmatprep.subr.bf16.mxu0 %v1639
        %1870 = vmatpush1.bf16.msra.mxu0 %v1638
        %1871 = vmatprep.subr.bf16.mxu0 %v1643
        %1872 = vmatpush1.bf16.msra.mxu0 %v1642
        %1873 = vmatprep.subr.bf16.mxu0 %v1647
        %1874 = vmatpush1.bf16.msra.mxu0 %v1646
        %1875 = vmatprep.subr.bf16.mxu0 %v1651
        %1876 = vmatpush1.bf16.msra.mxu0 %v1650
        %1877 = vmatprep.subr.bf16.mxu0 %v1655
        %1878 = vmatpush1.bf16.msra.mxu0 %v1654
        %1879 = vmatprep.subr.bf16.mxu0 %v1659
        %1880 = vmatpush1.bf16.msra.mxu0 %v1658
        %1881 = vmatprep.subr.bf16.mxu0 %v1663
        %1882 = vmatpush1.bf16.msra.mxu0 %v1662
        %1883 = vmatprep.subr.bf16.mxu0 %v1667
        %1884 = vmatpush1.bf16.msra.mxu0 %v1666
        %1885 = vmatprep.subr.bf16.mxu0 %v1671
        %1886 = vmatpush1.bf16.msra.mxu0 %v1670
        %1887 = vmatprep.subr.bf16.mxu0 %v1675
        %1888 = vmatpush1.bf16.msra.mxu0 %v1674
        %1889 = vmatprep.subr.bf16.mxu0 %v1679
        %1890 = vmatpush1.bf16.msra.mxu0 %v1678
        %1891 = vmatprep.subr.bf16.mxu0 %v1683
        %1892 = vmatpush1.bf16.msra.mxu0 %v1682
        %1893 = vmatprep.subr.bf16.mxu0 %v1687
        %1894 = vmatpush1.bf16.msra.mxu0 %v1686
        %1895 = vmatprep.subr.bf16.mxu0 %v1691
        %1896 = vmatpush1.bf16.msra.mxu0 %v1690
        %1897 = vmatprep.subr.bf16.mxu0 %v1695
        %1898 = vmatpush1.bf16.msra.mxu0 %v1694
        %1899 = vmatprep.subr.bf16.mxu0 %v1699
        %1900 = vmatpush1.bf16.msra.mxu0 %v1698
        %1901 = vmatprep.mubr.bf16.mxu0 %v686
        %1902 = vmatmul.mubr.bf16.gmra.mrb[0].mxu0 %v685
        %v1903 = vpop.f32.mrb[0].mxu0
        %v1904 = vadd.f32 %v1412, %v1903
        %v1905 = vpop.f32.mrb[0].mxu0
        %v1906 = vadd.f32 %v1414, %v1905
        %v1907 = vpop.f32.mrb[0].mxu0
        %v1908 = vadd.f32 %v1416, %v1907
        %v1909 = vpop.f32.mrb[0].mxu0
        %v1910 = vadd.f32 %v1418, %v1909
        %1911 = vdwg.mxu0
        %1912 = vmatprep.subr.bf16.mxu0 %v1703
        %1913 = vmatpush1.bf16.msra.mxu0 %v1702
        %1914 = vmatprep.subr.bf16.mxu0 %v1707
        %1915 = vmatpush1.bf16.msra.mxu0 %v1706
        %1916 = vmatprep.subr.bf16.mxu0 0
        %1917 = vmatpush1.bf16.msra.mxu0 0
        %1918 = vmatprep.subr.bf16.mxu0 0
        %1919 = vmatpush1.bf16.msra.mxu0 0
        %1920 = vmatprep.subr.bf16.mxu0 0
        %1921 = vmatpush1.bf16.msra.mxu0 0
        %1922 = vmatprep.subr.bf16.mxu0 0
        %1923 = vmatpush1.bf16.msra.mxu0 0
        %1924 = vmatprep.subr.bf16.mxu0 0
        %1925 = vmatpush1.bf16.msra.mxu0 0
        %1926 = vmatprep.subr.bf16.mxu0 0
        %1927 = vmatpush1.bf16.msra.mxu0 0
        %1928 = vmatprep.subr.bf16.mxu0 0
        %1929 = vmatpush1.bf16.msra.mxu0 0
        %1930 = vmatprep.subr.bf16.mxu0 0
        %1931 = vmatpush1.bf16.msra.mxu0 0
        %1932 = vmatprep.subr.bf16.mxu0 0
        %1933 = vmatpush1.bf16.msra.mxu0 0
        %1934 = vmatprep.subr.bf16.mxu0 0
        %1935 = vmatpush1.bf16.msra.mxu0 0
        %1936 = vmatprep.subr.bf16.mxu0 0
        %1937 = vmatpush1.bf16.msra.mxu0 0
        %1938 = vmatprep.subr.bf16.mxu0 0
        %1939 = vmatpush1.bf16.msra.mxu0 0
        %1940 = vmatprep.subr.bf16.mxu0 0
        %1941 = vmatpush1.bf16.msra.mxu0 0
        %1942 = vmatprep.subr.bf16.mxu0 0
        %1943 = vmatpush1.bf16.msra.mxu0 0
        %1944 = vmatprep.mubr.bf16.mxu0 0
        %1945 = vmatmul.mubr.bf16.gmra.mrb[0].mxu0 %v1781
        %v1946 = vpop.f32.mrb[0].mxu0
        %v1947 = vadd.f32 %v1904, %v1946
        %v1948 = vpop.f32.mrb[0].mxu0
        %v1949 = vadd.f32 %v1906, %v1948
        %v1950 = vpop.f32.mrb[0].mxu0
        %v1951 = vadd.f32 %v1908, %v1950
        %v1952 = vpop.f32.mrb[0].mxu0
        %v1953 = vadd.f32 %v1910, %v1952
        %1954 = vdwg.mxu0
        %v1955 = vld [vmem:[#allocation2] sm:$0xfc]
        %v1956 = vld [vmem:[#allocation2 + $0x8] sm:$0xfc]
        %v1957 = vld [vmem:[#allocation2 + $0x10] sm:$0xfc]
        %v1958 = vld [vmem:[#allocation2 + $0x30] sm:$0x3]
        %v1959 = vld [vmem:[#allocation2 + $0x38] sm:$0x3]
        %v1960 = vld [vmem:[#allocation2 + $0x40] sm:$0x3]
        %v1961 = vpack.c.bf16 %v682, %v1955
        %v1962 = vpack.c.bf16 %v683, %v1956
        %v1963 = vpack.c.bf16 %v684, %v1957
        %v1964 = vpack.c.bf16 %v1958, %v1958
        %v1965 = vpack.c.bf16 %v1959, %v1959
        %v1966 = vpack.c.bf16 %v1960, %v1960
        %s1967 = scalar_lea.vmem [#allocation3], 1152
        %v1968 = vld [vmem:[%s1967] sm:$0xff]
        %v1969 = vld [vmem:[%s1967 + $0x8] sm:$0xff]
        %v1970 = vld [vmem:[%s1967 + $0x10] sm:$0xff]
        %v1971 = vld [vmem:[%s1967 + $0x18] sm:$0xff]
        %v1972 = vld [vmem:[%s1967 + $0x20] sm:$0xff]
        %v1973 = vld [vmem:[%s1967 + $0x28] sm:$0xff]
        %v1974 = vld [vmem:[%s1967 + $0x30] sm:$0xff]
        %v1975 = vld [vmem:[%s1967 + $0x38] sm:$0xff]
        %v1976 = vld [vmem:[%s1967 + $0x40] sm:$0xff]
        %v1977 = vld [vmem:[%s1967 + $0x48] sm:$0xff]
        %v1978 = vld [vmem:[%s1967 + $0x50] sm:$0xff]
        %v1979 = vld [vmem:[%s1967 + $0x58] sm:$0xff]
        %v1980 = vld [vmem:[%s1967 + $0x60] sm:$0xff]
        %v1981 = vld [vmem:[%s1967 + $0x68] sm:$0xff]
        %v1982 = vld [vmem:[%s1967 + $0x70] sm:$0xff]
        %v1983 = vld [vmem:[%s1967 + $0x78] sm:$0xff]
        %v1984 = vld [vmem:[%s1967 + $0x80] sm:$0xff]
        %v1985 = vld [vmem:[%s1967 + $0x88] sm:$0xff]
        %v1986 = vld [vmem:[%s1967 + $0x90] sm:$0xff]
        %v1987 = vld [vmem:[%s1967 + $0x98] sm:$0xff]
        %v1988 = vld [vmem:[%s1967 + $0xa0] sm:$0xff]
        %v1989 = vld [vmem:[%s1967 + $0xa8] sm:$0xff]
        %v1990 = vld [vmem:[%s1967 + $0xb0] sm:$0xff]
        %v1991 = vld [vmem:[%s1967 + $0xb8] sm:$0xff]
        %v1992 = vld [vmem:[%s1967 + $0xc0] sm:$0xff]
        %v1993 = vld [vmem:[%s1967 + $0xc8] sm:$0xff]
        %v1994 = vld [vmem:[%s1967 + $0xd0] sm:$0xff]
        %v1995 = vld [vmem:[%s1967 + $0xd8] sm:$0xff]
        %v1996 = vld [vmem:[%s1967 + $0xe0] sm:$0xff]
        %v1997 = vld [vmem:[%s1967 + $0xe8] sm:$0xff]
        %v1998 = vld [vmem:[%s1967 + $0xf0] sm:$0xff]
        %v1999 = vld [vmem:[%s1967 + $0xf8] sm:$0xff]
        %v2000 = vld [vmem:[%s1967 + $0x100] sm:$0xff]
        %v2001 = vld [vmem:[%s1967 + $0x108] sm:$0xff]
        %v2002 = vld [vmem:[%s1967 + $0x110] sm:$0xff]
        %v2003 = vld [vmem:[%s1967 + $0x118] sm:$0xff]
        %v2004 = vld [vmem:[%s1967 + $0x120] sm:$0xff]
        %v2005 = vld [vmem:[%s1967 + $0x128] sm:$0xff]
        %v2006 = vld [vmem:[%s1967 + $0x130] sm:$0xff]
        %v2007 = vld [vmem:[%s1967 + $0x138] sm:$0xff]
        %v2008 = vld [vmem:[%s1967 + $0x140] sm:$0xff]
        %v2009 = vld [vmem:[%s1967 + $0x148] sm:$0xff]
        %v2010 = vld [vmem:[%s1967 + $0x150] sm:$0xff]
        %v2011 = vld [vmem:[%s1967 + $0x158] sm:$0xff]
        %v2012 = vld [vmem:[%s1967 + $0x160] sm:$0xff]
        %v2013 = vld [vmem:[%s1967 + $0x168] sm:$0xff]
        %v2014 = vld [vmem:[%s1967 + $0x170] sm:$0xff]
        %v2015 = vld [vmem:[%s1967 + $0x178] sm:$0xff]
        %v2016 = vld [vmem:[%s1967 + $0x180] sm:$0xff]
        %v2017 = vld [vmem:[%s1967 + $0x188] sm:$0xff]
        %v2018 = vld [vmem:[%s1967 + $0x190] sm:$0xff]
        %v2019 = vld [vmem:[%s1967 + $0x198] sm:$0xff]
        %v2020 = vld [vmem:[%s1967 + $0x1a0] sm:$0xff]
        %v2021 = vld [vmem:[%s1967 + $0x1a8] sm:$0xff]
        %v2022 = vld [vmem:[%s1967 + $0x1b0] sm:$0xff]
        %v2023 = vld [vmem:[%s1967 + $0x1b8] sm:$0xff]
        %v2024 = vld [vmem:[%s1967 + $0x1c0] sm:$0xff]
        %v2025 = vld [vmem:[%s1967 + $0x1c8] sm:$0xff]
        %v2026 = vld [vmem:[%s1967 + $0x1d0] sm:$0xff]
        %v2027 = vld [vmem:[%s1967 + $0x1d8] sm:$0xff]
        %v2028 = vld [vmem:[%s1967 + $0x1e0] sm:$0xff]
        %v2029 = vld [vmem:[%s1967 + $0x1e8] sm:$0xff]
        %v2030 = vld [vmem:[%s1967 + $0x1f0] sm:$0xff]
        %v2031 = vld [vmem:[%s1967 + $0x1f8] sm:$0xff]
        %v2032 = vld [vmem:[%s1967 + $0x200] sm:$0xff]
        %v2033 = vld [vmem:[%s1967 + $0x208] sm:$0xff]
        %v2034 = vld [vmem:[%s1967 + $0x210] sm:$0xff]
        %v2035 = vld [vmem:[%s1967 + $0x218] sm:$0xff]
        %v2036 = vld [vmem:[%s1967 + $0x220] sm:$0xff]
        %v2037 = vld [vmem:[%s1967 + $0x228] sm:$0xff]
        %v2038 = vld [vmem:[%s1967 + $0x230] sm:$0xff]
        %v2039 = vld [vmem:[%s1967 + $0x238] sm:$0xff]
        %vm2046 = vcmask 1046528
        %v2047 = vrot.slane %v1961, 1
        %v2048 = vrot.slane %v1964, 1
        %v2049 = vsel %vm2046, %v2047, %v2048
        %v2050 = vrot.slane %v1962, 1
        %v2051 = vrot.slane %v1965, 1
        %v2052 = vsel %vm2046, %v2050, %v2051
        %v2053 = vrot.slane %v1963, 1
        %v2054 = vrot.slane %v1966, 1
        %v2055 = vsel %vm2046, %v2053, %v2054
        %v2130 = vunpack.c.l.b16 %v1968
        %v2131 = vunpack.c.h.b16 %v1968
        %v2132 = vunpack.c.l.b16 %v1969
        %v2133 = vunpack.c.h.b16 %v1969
        %v2134 = vunpack.c.l.b16 %v1970
        %v2135 = vunpack.c.h.b16 %v1970
        %v2136 = vunpack.c.l.b16 %v1971
        %v2137 = vunpack.c.h.b16 %v1971
        %v2138 = vunpack.c.l.b16 %v1972
        %v2139 = vunpack.c.h.b16 %v1972
        %v2140 = vunpack.c.l.b16 %v1973
        %v2141 = vunpack.c.h.b16 %v1973
        %v2142 = vunpack.c.l.b16 %v1974
        %v2143 = vunpack.c.h.b16 %v1974
        %v2144 = vunpack.c.l.b16 %v1975
        %v2145 = vunpack.c.h.b16 %v1975
        %v2146 = vunpack.c.l.b16 %v1976
        %v2147 = vunpack.c.h.b16 %v1976
        %v2148 = vunpack.c.l.b16 %v1977
        %v2149 = vunpack.c.h.b16 %v1977
        %v2150 = vunpack.c.l.b16 %v1978
        %v2151 = vunpack.c.h.b16 %v1978
        %v2152 = vunpack.c.l.b16 %v1979
        %v2153 = vunpack.c.h.b16 %v1979
        %v2154 = vunpack.c.l.b16 %v1980
        %v2155 = vunpack.c.h.b16 %v1980
        %v2156 = vunpack.c.l.b16 %v1981
        %v2157 = vunpack.c.h.b16 %v1981
        %v2158 = vunpack.c.l.b16 %v1982
        %v2159 = vunpack.c.h.b16 %v1982
        %v2160 = vunpack.c.l.b16 %v1983
        %v2161 = vunpack.c.h.b16 %v1983
        %v2162 = vunpack.c.l.b16 %v1984
        %v2163 = vunpack.c.h.b16 %v1984
        %v2164 = vunpack.c.l.b16 %v1985
        %v2165 = vunpack.c.h.b16 %v1985
        %v2166 = vunpack.c.l.b16 %v1986
        %v2167 = vunpack.c.h.b16 %v1986
        %v2168 = vunpack.c.l.b16 %v1987
        %v2169 = vunpack.c.h.b16 %v1987
        %v2170 = vunpack.c.l.b16 %v1988
        %v2171 = vunpack.c.h.b16 %v1988
        %v2172 = vunpack.c.l.b16 %v1989
        %v2173 = vunpack.c.h.b16 %v1989
        %v2174 = vunpack.c.l.b16 %v1990
        %v2175 = vunpack.c.h.b16 %v1990
        %v2176 = vunpack.c.l.b16 %v1991
        %v2177 = vunpack.c.h.b16 %v1991
        %v2178 = vunpack.c.l.b16 %v1992
        %v2179 = vunpack.c.h.b16 %v1992
        %v2180 = vunpack.c.l.b16 %v1993
        %v2181 = vunpack.c.h.b16 %v1993
        %v2182 = vunpack.c.l.b16 %v1994
        %v2183 = vunpack.c.h.b16 %v1994
        %v2184 = vunpack.c.l.b16 %v1995
        %v2185 = vunpack.c.h.b16 %v1995
        %v2186 = vunpack.c.l.b16 %v1996
        %v2187 = vunpack.c.h.b16 %v1996
        %v2188 = vunpack.c.l.b16 %v1997
        %v2189 = vunpack.c.h.b16 %v1997
        %v2190 = vunpack.c.l.b16 %v1998
        %v2191 = vunpack.c.h.b16 %v1998
        %v2192 = vunpack.c.l.b16 %v1999
        %v2193 = vunpack.c.h.b16 %v1999
        %v2194 = vunpack.c.l.b16 %v2000
        %v2195 = vunpack.c.h.b16 %v2000
        %v2196 = vunpack.c.l.b16 %v2001
        %v2197 = vunpack.c.h.b16 %v2001
        %v2198 = vunpack.c.l.b16 %v2002
        %v2199 = vunpack.c.h.b16 %v2002
        %v2200 = vunpack.c.l.b16 %v2003
        %v2201 = vunpack.c.h.b16 %v2003
        %v2202 = vunpack.c.l.b16 %v2004
        %v2203 = vunpack.c.h.b16 %v2004
        %v2204 = vunpack.c.l.b16 %v2005
        %v2205 = vunpack.c.h.b16 %v2005
        %v2206 = vunpack.c.l.b16 %v2006
        %v2207 = vunpack.c.h.b16 %v2006
        %v2208 = vunpack.c.l.b16 %v2007
        %v2209 = vunpack.c.h.b16 %v2007
        %v2210 = vunpack.c.l.b16 %v2008
        %v2211 = vunpack.c.h.b16 %v2008
        %v2212 = vunpack.c.l.b16 %v2009
        %v2213 = vunpack.c.h.b16 %v2009
        %v2214 = vunpack.c.l.b16 %v2010
        %v2215 = vunpack.c.h.b16 %v2010
        %v2216 = vunpack.c.l.b16 %v2011
        %v2217 = vunpack.c.h.b16 %v2011
        %v2218 = vunpack.c.l.b16 %v2012
        %v2219 = vunpack.c.h.b16 %v2012
        %v2220 = vunpack.c.l.b16 %v2013
        %v2221 = vunpack.c.h.b16 %v2013
        %v2222 = vunpack.c.l.b16 %v2014
        %v2223 = vunpack.c.h.b16 %v2014
        %v2224 = vunpack.c.l.b16 %v2015
        %v2225 = vunpack.c.h.b16 %v2015
        %v2226 = vunpack.c.l.b16 %v2016
        %v2227 = vunpack.c.h.b16 %v2016
        %v2228 = vunpack.c.l.b16 %v2017
        %v2229 = vunpack.c.h.b16 %v2017
        %v2230 = vunpack.c.l.b16 %v2018
        %v2231 = vunpack.c.h.b16 %v2018
        %v2232 = vunpack.c.l.b16 %v2019
        %v2233 = vunpack.c.h.b16 %v2019
        %v2234 = vunpack.c.l.b16 %v2020
        %v2235 = vunpack.c.h.b16 %v2020
        %v2236 = vunpack.c.l.b16 %v2021
        %v2237 = vunpack.c.h.b16 %v2021
        %v2238 = vunpack.c.l.b16 %v2022
        %v2239 = vunpack.c.h.b16 %v2022
        %v2240 = vunpack.c.l.b16 %v2023
        %v2241 = vunpack.c.h.b16 %v2023
        %v2242 = vunpack.c.l.b16 %v2024
        %v2243 = vunpack.c.h.b16 %v2024
        %v2244 = vunpack.c.l.b16 %v2025
        %v2245 = vunpack.c.h.b16 %v2025
        %v2246 = vunpack.c.l.b16 %v2026
        %v2247 = vunpack.c.h.b16 %v2026
        %v2248 = vunpack.c.l.b16 %v2027
        %v2249 = vunpack.c.h.b16 %v2027
        %v2250 = vunpack.c.l.b16 %v2028
        %v2251 = vunpack.c.h.b16 %v2028
        %v2252 = vunpack.c.l.b16 %v2029
        %v2253 = vunpack.c.h.b16 %v2029
        %v2254 = vunpack.c.l.b16 %v2030
        %v2255 = vunpack.c.h.b16 %v2030
        %v2256 = vunpack.c.l.b16 %v2031
        %v2257 = vunpack.c.h.b16 %v2031
        %v2258 = vunpack.c.l.b16 %v2032
        %v2259 = vunpack.c.h.b16 %v2032
        %v2260 = vunpack.c.l.b16 %v2033
        %v2261 = vunpack.c.h.b16 %v2033
        %v2262 = vunpack.c.l.b16 %v2034
        %v2263 = vunpack.c.h.b16 %v2034
        %v2264 = vunpack.c.l.b16 %v2035
        %v2265 = vunpack.c.h.b16 %v2035
        %v2266 = vunpack.c.l.b16 %v2036
        %v2267 = vunpack.c.h.b16 %v2036
        %v2268 = vunpack.c.l.b16 %v2037
        %v2269 = vunpack.c.h.b16 %v2037
        %v2270 = vunpack.c.l.b16 %v2038
        %v2271 = vunpack.c.h.b16 %v2038
        %v2272 = vunpack.c.l.b16 %v2039
        %v2273 = vunpack.c.h.b16 %v2039
        %v2274 = vpack.c.b16 %v2134, %v2130
        %v2275 = vpack.c.b16 %v2135, %v2131
        %v2276 = vpack.c.b16 %v2136, %v2132
        %v2277 = vpack.c.b16 %v2137, %v2133
        %v2278 = vpack.c.b16 %v2142, %v2138
        %v2279 = vpack.c.b16 %v2143, %v2139
        %v2280 = vpack.c.b16 %v2144, %v2140
        %v2281 = vpack.c.b16 %v2145, %v2141
        %v2282 = vpack.c.b16 %v2150, %v2146
        %v2283 = vpack.c.b16 %v2151, %v2147
        %v2284 = vpack.c.b16 %v2152, %v2148
        %v2285 = vpack.c.b16 %v2153, %v2149
        %v2286 = vpack.c.b16 %v2158, %v2154
        %v2287 = vpack.c.b16 %v2159, %v2155
        %v2288 = vpack.c.b16 %v2160, %v2156
        %v2289 = vpack.c.b16 %v2161, %v2157
        %v2290 = vpack.c.b16 %v2166, %v2162
        %v2291 = vpack.c.b16 %v2167, %v2163
        %v2292 = vpack.c.b16 %v2168, %v2164
        %v2293 = vpack.c.b16 %v2169, %v2165
        %v2294 = vpack.c.b16 %v2174, %v2170
        %v2295 = vpack.c.b16 %v2175, %v2171
        %v2296 = vpack.c.b16 %v2176, %v2172
        %v2297 = vpack.c.b16 %v2177, %v2173
        %v2298 = vpack.c.b16 %v2182, %v2178
        %v2299 = vpack.c.b16 %v2183, %v2179
        %v2300 = vpack.c.b16 %v2184, %v2180
        %v2301 = vpack.c.b16 %v2185, %v2181
        %v2302 = vpack.c.b16 %v2190, %v2186
        %v2303 = vpack.c.b16 %v2191, %v2187
        %v2304 = vpack.c.b16 %v2192, %v2188
        %v2305 = vpack.c.b16 %v2193, %v2189
        %v2306 = vpack.c.b16 %v2198, %v2194
        %v2307 = vpack.c.b16 %v2199, %v2195
        %v2308 = vpack.c.b16 %v2200, %v2196
        %v2309 = vpack.c.b16 %v2201, %v2197
        %v2310 = vpack.c.b16 %v2206, %v2202
        %v2311 = vpack.c.b16 %v2207, %v2203
        %v2312 = vpack.c.b16 %v2208, %v2204
        %v2313 = vpack.c.b16 %v2209, %v2205
        %v2314 = vpack.c.b16 %v2214, %v2210
        %v2315 = vpack.c.b16 %v2215, %v2211
        %v2316 = vpack.c.b16 %v2216, %v2212
        %v2317 = vpack.c.b16 %v2217, %v2213
        %v2318 = vpack.c.b16 %v2222, %v2218
        %v2319 = vpack.c.b16 %v2223, %v2219
        %v2320 = vpack.c.b16 %v2224, %v2220
        %v2321 = vpack.c.b16 %v2225, %v2221
        %v2322 = vpack.c.b16 %v2230, %v2226
        %v2323 = vpack.c.b16 %v2231, %v2227
        %v2324 = vpack.c.b16 %v2232, %v2228
        %v2325 = vpack.c.b16 %v2233, %v2229
        %v2326 = vpack.c.b16 %v2238, %v2234
        %v2327 = vpack.c.b16 %v2239, %v2235
        %v2328 = vpack.c.b16 %v2240, %v2236
        %v2329 = vpack.c.b16 %v2241, %v2237
        %v2330 = vpack.c.b16 %v2246, %v2242
        %v2331 = vpack.c.b16 %v2247, %v2243
        %v2332 = vpack.c.b16 %v2248, %v2244
        %v2333 = vpack.c.b16 %v2249, %v2245
        %v2334 = vpack.c.b16 %v2254, %v2250
        %v2335 = vpack.c.b16 %v2255, %v2251
        %v2336 = vpack.c.b16 %v2256, %v2252
        %v2337 = vpack.c.b16 %v2257, %v2253
        %v2338 = vpack.c.b16 %v2262, %v2258
        %v2339 = vpack.c.b16 %v2263, %v2259
        %v2340 = vpack.c.b16 %v2264, %v2260
        %v2341 = vpack.c.b16 %v2265, %v2261
        %v2342 = vpack.c.b16 %v2270, %v2266
        %v2343 = vpack.c.b16 %v2271, %v2267
        %v2344 = vpack.c.b16 %v2272, %v2268
        %v2345 = vpack.c.b16 %v2273, %v2269
        %v2419 = vsel %vm1244, %v2055, 0
        %2421 = vmatprep.subr.bf16.mxu0 %v2275
        %2422 = vmatpush1.bf16.msra.mxu0 %v2274
        %2423 = vmatprep.subr.bf16.mxu0 %v2279
        %2424 = vmatpush1.bf16.msra.mxu0 %v2278
        %2425 = vmatprep.subr.bf16.mxu0 %v2283
        %2426 = vmatpush1.bf16.msra.mxu0 %v2282
        %2427 = vmatprep.subr.bf16.mxu0 %v2287
        %2428 = vmatpush1.bf16.msra.mxu0 %v2286
        %2429 = vmatprep.subr.bf16.mxu0 %v2291
        %2430 = vmatpush1.bf16.msra.mxu0 %v2290
        %2431 = vmatprep.subr.bf16.mxu0 %v2295
        %2432 = vmatpush1.bf16.msra.mxu0 %v2294
        %2433 = vmatprep.subr.bf16.mxu0 %v2299
        %2434 = vmatpush1.bf16.msra.mxu0 %v2298
        %2435 = vmatprep.subr.bf16.mxu0 %v2303
        %2436 = vmatpush1.bf16.msra.mxu0 %v2302
        %2437 = vmatprep.subr.bf16.mxu0 %v2307
        %2438 = vmatpush1.bf16.msra.mxu0 %v2306
        %2439 = vmatprep.subr.bf16.mxu0 %v2311
        %2440 = vmatpush1.bf16.msra.mxu0 %v2310
        %2441 = vmatprep.subr.bf16.mxu0 %v2315
        %2442 = vmatpush1.bf16.msra.mxu0 %v2314
        %2443 = vmatprep.subr.bf16.mxu0 %v2319
        %2444 = vmatpush1.bf16.msra.mxu0 %v2318
        %2445 = vmatprep.subr.bf16.mxu0 %v2323
        %2446 = vmatpush1.bf16.msra.mxu0 %v2322
        %2447 = vmatprep.subr.bf16.mxu0 %v2327
        %2448 = vmatpush1.bf16.msra.mxu0 %v2326
        %2449 = vmatprep.subr.bf16.mxu0 %v2331
        %2450 = vmatpush1.bf16.msra.mxu0 %v2330
        %2451 = vmatprep.subr.bf16.mxu0 %v2335
        %2452 = vmatpush1.bf16.msra.mxu0 %v2334
        %2453 = vmatprep.mubr.bf16.mxu0 %v2052
        %2454 = vmatmul.mubr.bf16.gmra.mrb[0].mxu0 %v2049
        %v2455 = vpop.f32.mrb[0].mxu0
        %v2456 = vadd.f32 0.0, %v2455
        %v2457 = vpop.f32.mrb[0].mxu0
        %v2458 = vadd.f32 0.0, %v2457
        %v2459 = vpop.f32.mrb[0].mxu0
        %v2460 = vadd.f32 0.0, %v2459
        %v2461 = vpop.f32.mrb[0].mxu0
        %v2462 = vadd.f32 0.0, %v2461
        %2463 = vdwg.mxu0
        %2464 = vmatprep.subr.bf16.mxu0 %v2339
        %2465 = vmatpush1.bf16.msra.mxu0 %v2338
        %2466 = vmatprep.subr.bf16.mxu0 %v2343
        %2467 = vmatpush1.bf16.msra.mxu0 %v2342
        %2468 = vmatprep.subr.bf16.mxu0 0
        %2469 = vmatpush1.bf16.msra.mxu0 0
        %2470 = vmatprep.subr.bf16.mxu0 0
        %2471 = vmatpush1.bf16.msra.mxu0 0
        %2472 = vmatprep.subr.bf16.mxu0 0
        %2473 = vmatpush1.bf16.msra.mxu0 0
        %2474 = vmatprep.subr.bf16.mxu0 0
        %2475 = vmatpush1.bf16.msra.mxu0 0
        %2476 = vmatprep.subr.bf16.mxu0 0
        %2477 = vmatpush1.bf16.msra.mxu0 0
        %2478 = vmatprep.subr.bf16.mxu0 0
        %2479 = vmatpush1.bf16.msra.mxu0 0
        %2480 = vmatprep.subr.bf16.mxu0 0
        %2481 = vmatpush1.bf16.msra.mxu0 0
        %2482 = vmatprep.subr.bf16.mxu0 0
        %2483 = vmatpush1.bf16.msra.mxu0 0
        %2484 = vmatprep.subr.bf16.mxu0 0
        %2485 = vmatpush1.bf16.msra.mxu0 0
        %2486 = vmatprep.subr.bf16.mxu0 0
        %2487 = vmatpush1.bf16.msra.mxu0 0
        %2488 = vmatprep.subr.bf16.mxu0 0
        %2489 = vmatpush1.bf16.msra.mxu0 0
        %2490 = vmatprep.subr.bf16.mxu0 0
        %2491 = vmatpush1.bf16.msra.mxu0 0
        %2492 = vmatprep.subr.bf16.mxu0 0
        %2493 = vmatpush1.bf16.msra.mxu0 0
        %2494 = vmatprep.subr.bf16.mxu0 0
        %2495 = vmatpush1.bf16.msra.mxu0 0
        %2496 = vmatprep.mubr.bf16.mxu0 0
        %2497 = vmatmul.mubr.bf16.gmra.mrb[0].mxu0 %v2419
        %v2498 = vpop.f32.mrb[0].mxu0
        %v2499 = vadd.f32 %v2456, %v2498
        %v2500 = vpop.f32.mrb[0].mxu0
        %v2501 = vadd.f32 %v2458, %v2500
        %v2502 = vpop.f32.mrb[0].mxu0
        %v2503 = vadd.f32 %v2460, %v2502
        %v2504 = vpop.f32.mrb[0].mxu0
        %v2505 = vadd.f32 %v2462, %v2504
        %2506 = vdwg.mxu0
        %2507 = vmatprep.subr.bf16.mxu0 %v2277
        %2508 = vmatpush1.bf16.msra.mxu0 %v2276
        %2509 = vmatprep.subr.bf16.mxu0 %v2281
        %2510 = vmatpush1.bf16.msra.mxu0 %v2280
        %2511 = vmatprep.subr.bf16.mxu0 %v2285
        %2512 = vmatpush1.bf16.msra.mxu0 %v2284
        %2513 = vmatprep.subr.bf16.mxu0 %v2289
        %2514 = vmatpush1.bf16.msra.mxu0 %v2288
        %2515 = vmatprep.subr.bf16.mxu0 %v2293
        %2516 = vmatpush1.bf16.msra.mxu0 %v2292
        %2517 = vmatprep.subr.bf16.mxu0 %v2297
        %2518 = vmatpush1.bf16.msra.mxu0 %v2296
        %2519 = vmatprep.subr.bf16.mxu0 %v2301
        %2520 = vmatpush1.bf16.msra.mxu0 %v2300
        %2521 = vmatprep.subr.bf16.mxu0 %v2305
        %2522 = vmatpush1.bf16.msra.mxu0 %v2304
        %2523 = vmatprep.subr.bf16.mxu0 %v2309
        %2524 = vmatpush1.bf16.msra.mxu0 %v2308
        %2525 = vmatprep.subr.bf16.mxu0 %v2313
        %2526 = vmatpush1.bf16.msra.mxu0 %v2312
        %2527 = vmatprep.subr.bf16.mxu0 %v2317
        %2528 = vmatpush1.bf16.msra.mxu0 %v2316
        %2529 = vmatprep.subr.bf16.mxu0 %v2321
        %2530 = vmatpush1.bf16.msra.mxu0 %v2320
        %2531 = vmatprep.subr.bf16.mxu0 %v2325
        %2532 = vmatpush1.bf16.msra.mxu0 %v2324
        %2533 = vmatprep.subr.bf16.mxu0 %v2329
        %2534 = vmatpush1.bf16.msra.mxu0 %v2328
        %2535 = vmatprep.subr.bf16.mxu0 %v2333
        %2536 = vmatpush1.bf16.msra.mxu0 %v2332
        %2537 = vmatprep.subr.bf16.mxu0 %v2337
        %2538 = vmatpush1.bf16.msra.mxu0 %v2336
        %2539 = vmatprep.mubr.bf16.mxu0 %v2052
        %2540 = vmatmul.mubr.bf16.gmra.mrb[0].mxu0 %v2049
        %v2541 = vpop.f32.mrb[0].mxu0
        %v2542 = vadd.f32 0.0, %v2541
        %v2543 = vpop.f32.mrb[0].mxu0
        %v2544 = vadd.f32 0.0, %v2543
        %v2545 = vpop.f32.mrb[0].mxu0
        %v2546 = vadd.f32 0.0, %v2545
        %v2547 = vpop.f32.mrb[0].mxu0
        %v2548 = vadd.f32 0.0, %v2547
        %2549 = vdwg.mxu0
        %2550 = vmatprep.subr.bf16.mxu0 %v2341
        %2551 = vmatpush1.bf16.msra.mxu0 %v2340
        %2552 = vmatprep.subr.bf16.mxu0 %v2345
        %2553 = vmatpush1.bf16.msra.mxu0 %v2344
        %2554 = vmatprep.subr.bf16.mxu0 0
        %2555 = vmatpush1.bf16.msra.mxu0 0
        %2556 = vmatprep.subr.bf16.mxu0 0
        %2557 = vmatpush1.bf16.msra.mxu0 0
        %2558 = vmatprep.subr.bf16.mxu0 0
        %2559 = vmatpush1.bf16.msra.mxu0 0
        %2560 = vmatprep.subr.bf16.mxu0 0
        %2561 = vmatpush1.bf16.msra.mxu0 0
        %2562 = vmatprep.subr.bf16.mxu0 0
        %2563 = vmatpush1.bf16.msra.mxu0 0
        %2564 = vmatprep.subr.bf16.mxu0 0
        %2565 = vmatpush1.bf16.msra.mxu0 0
        %2566 = vmatprep.subr.bf16.mxu0 0
        %2567 = vmatpush1.bf16.msra.mxu0 0
        %2568 = vmatprep.subr.bf16.mxu0 0
        %2569 = vmatpush1.bf16.msra.mxu0 0
        %2570 = vmatprep.subr.bf16.mxu0 0
        %2571 = vmatpush1.bf16.msra.mxu0 0
        %2572 = vmatprep.subr.bf16.mxu0 0
        %2573 = vmatpush1.bf16.msra.mxu0 0
        %2574 = vmatprep.subr.bf16.mxu0 0
        %2575 = vmatpush1.bf16.msra.mxu0 0
        %2576 = vmatprep.subr.bf16.mxu0 0
        %2577 = vmatpush1.bf16.msra.mxu0 0
        %2578 = vmatprep.subr.bf16.mxu0 0
        %2579 = vmatpush1.bf16.msra.mxu0 0
        %2580 = vmatprep.subr.bf16.mxu0 0
        %2581 = vmatpush1.bf16.msra.mxu0 0
        %2582 = vmatprep.mubr.bf16.mxu0 0
        %2583 = vmatmul.mubr.bf16.gmra.mrb[0].mxu0 %v2419
        %v2584 = vpop.f32.mrb[0].mxu0
        %v2585 = vadd.f32 %v2542, %v2584
        %v2586 = vpop.f32.mrb[0].mxu0
        %v2587 = vadd.f32 %v2544, %v2586
        %v2588 = vpop.f32.mrb[0].mxu0
        %v2589 = vadd.f32 %v2546, %v2588
        %v2590 = vpop.f32.mrb[0].mxu0
        %v2591 = vadd.f32 %v2548, %v2590
        %2592 = vdwg.mxu0
        %v2593 = vadd.f32 %v1861, %v2499
        %v2594 = vadd.f32 %v1863, %v2501
        %v2595 = vadd.f32 %v1947, %v2585
        %v2596 = vadd.f32 %v1949, %v2587
        %v2597 = vadd.f32 %v1865, %v2503
        %v2598 = vadd.f32 %v1867, %v2505
        %v2599 = vadd.f32 %v1951, %v2589
        %v2600 = vadd.f32 %v1953, %v2591
        %v2601 = vld [vmem:[%s4] sm:$0xf]
        %v2603 = vlaneseq
        %v2604 = vshrl.u32 %v2603, 7
        %v2605 = vsub.s32 0, %v2604
        %v2606 = vrot.slane %v2601, %v2605
        %v2607 = vlaneseq
        %v2608 = vshrl.u32 %v2607, 7
        %v2609 = vsub.s32 1, %v2608
        %v2610 = vrot.slane %v2601, %v2609
        %v2611 = vlaneseq
        %v2612 = vshrl.u32 %v2611, 7
        %v2613 = vsub.s32 2, %v2612
        %v2614 = vrot.slane %v2601, %v2613
        %v2615 = vlaneseq
        %v2616 = vshrl.u32 %v2615, 7
        %v2617 = vsub.s32 3, %v2616
        %v2618 = vrot.slane %v2601, %v2617
        %v2623 = vadd.f32 %v2593, %v2606
        %v2624 = vadd.f32 %v2594, %v2610
        %v2625 = vadd.f32 %v2595, %v2614
        %v2626 = vadd.f32 %v2596, %v2618
        %v2627 = vadd.f32 %v2597, %v2606
        %v2628 = vadd.f32 %v2598, %v2610
        %v2629 = vadd.f32 %v2599, %v2614
        %v2630 = vadd.f32 %v2600, %v2618
        %v2631 = vmax.f32 %v2623, 0.0
        %v2632 = vmax.f32 %v2624, 0.0
        %v2633 = vmax.f32 %v2625, 0.0
        %v2634 = vmax.f32 %v2626, 0.0
        %v2635 = vmax.f32 %v2627, 0.0
        %v2636 = vmax.f32 %v2628, 0.0
        %v2637 = vmax.f32 %v2629, 0.0
        %v2638 = vmax.f32 %v2630, 0.0
        %v2639 = vadd.f32 %v2631, %v2635
        %v2640 = vrot.slane %v2639, 4
        %v2641 = vadd.f32 %v2639, %v2640
        %v2642 = vrot.slane %v2641, 2
        %v2643 = vadd.f32 %v2641, %v2642
        %v2644 = vrot.slane %v2643, 1
        %v2645 = vadd.f32 %v2643, %v2644
        %v2646 = vadd.f32 %v2632, %v2636
        %v2647 = vrot.slane %v2646, 4
        %v2648 = vadd.f32 %v2646, %v2647
        %v2649 = vrot.slane %v2648, 2
        %v2650 = vadd.f32 %v2648, %v2649
        %v2651 = vrot.slane %v2650, 1
        %v2652 = vadd.f32 %v2650, %v2651
        %v2653 = vadd.f32 %v2633, %v2637
        %v2654 = vrot.slane %v2653, 4
        %v2655 = vadd.f32 %v2653, %v2654
        %v2656 = vrot.slane %v2655, 2
        %v2657 = vadd.f32 %v2655, %v2656
        %v2658 = vrot.slane %v2657, 1
        %v2659 = vadd.f32 %v2657, %v2658
        %v2660 = vadd.f32 %v2634, %v2638
        %v2661 = vrot.slane %v2660, 4
        %v2662 = vadd.f32 %v2660, %v2661
        %v2663 = vrot.slane %v2662, 2
        %v2664 = vadd.f32 %v2662, %v2663
        %v2665 = vrot.slane %v2664, 1
        %v2666 = vadd.f32 %v2664, %v2665
        %v2667 = vld [vmem:[%s5] sm:$0xff]
        %v2668 = vld [vmem:[%s5 + $0x8] sm:$0xff]
        %v2669 = vld [vmem:[%s5 + $0x10] sm:$0xff]
        %v2670 = vld [vmem:[%s5 + $0x18] sm:$0xff]
        %v2671 = vld [vmem:[%s5 + $0x20] sm:$0xff]
        %v2672 = vld [vmem:[%s5 + $0x28] sm:$0xff]
        %v2673 = vld [vmem:[%s5 + $0x30] sm:$0xff]
        %v2674 = vld [vmem:[%s5 + $0x38] sm:$0xff]
        %v2675 = vld [vmem:[%s5 + $0x40] sm:$0xff]
        %v2676 = vld [vmem:[%s5 + $0x48] sm:$0xff]
        %v2677 = vld [vmem:[%s5 + $0x50] sm:$0xff]
        %v2678 = vld [vmem:[%s5 + $0x58] sm:$0xff]
        %v2679 = vld [vmem:[%s5 + $0x60] sm:$0xff]
        %v2680 = vld [vmem:[%s5 + $0x68] sm:$0xff]
        %v2681 = vld [vmem:[%s5 + $0x70] sm:$0xff]
        %v2682 = vld [vmem:[%s5 + $0x78] sm:$0xff]
        %v2683 = vld [vmem:[%s5 + $0x80] sm:$0xff]
        %v2684 = vld [vmem:[%s5 + $0x88] sm:$0xff]
        %v2685 = vld [vmem:[%s5 + $0x90] sm:$0xff]
        %v2686 = vld [vmem:[%s5 + $0x98] sm:$0xff]
        %v2687 = vld [vmem:[%s5 + $0xa0] sm:$0xff]
        %v2688 = vld [vmem:[%s5 + $0xa8] sm:$0xff]
        %v2689 = vld [vmem:[%s5 + $0xb0] sm:$0xff]
        %v2690 = vld [vmem:[%s5 + $0xb8] sm:$0xff]
        %v2691 = vld [vmem:[%s5 + $0xc0] sm:$0xff]
        %v2692 = vld [vmem:[%s5 + $0xc8] sm:$0xff]
        %v2693 = vld [vmem:[%s5 + $0xd0] sm:$0xff]
        %v2694 = vld [vmem:[%s5 + $0xd8] sm:$0xff]
        %v2695 = vld [vmem:[%s5 + $0xe0] sm:$0xff]
        %v2696 = vld [vmem:[%s5 + $0xe8] sm:$0xff]
        %v2697 = vld [vmem:[%s5 + $0xf0] sm:$0xff]
        %v2698 = vld [vmem:[%s5 + $0xf8] sm:$0xff]
        %v2699 = vld [vmem:[%s5 + $0x100] sm:$0xff]
        %v2700 = vld [vmem:[%s5 + $0x108] sm:$0xff]
        %v2701 = vld [vmem:[%s5 + $0x110] sm:$0xff]
        %v2702 = vld [vmem:[%s5 + $0x118] sm:$0xff]
        %v2703 = vld [vmem:[%s5 + $0x120] sm:$0xff]
        %v2704 = vld [vmem:[%s5 + $0x128] sm:$0xff]
        %v2705 = vld [vmem:[%s5 + $0x130] sm:$0xff]
        %v2706 = vld [vmem:[%s5 + $0x138] sm:$0xff]
        %v2707 = vld [vmem:[%s5 + $0x140] sm:$0xff]
        %v2708 = vld [vmem:[%s5 + $0x148] sm:$0xff]
        %v2709 = vld [vmem:[%s5 + $0x150] sm:$0xff]
        %v2710 = vld [vmem:[%s5 + $0x158] sm:$0xff]
        %v2711 = vld [vmem:[%s5 + $0x160] sm:$0xff]
        %v2712 = vld [vmem:[%s5 + $0x168] sm:$0xff]
        %v2713 = vld [vmem:[%s5 + $0x170] sm:$0xff]
        %v2714 = vld [vmem:[%s5 + $0x178] sm:$0xff]
        %v2715 = vld [vmem:[%s5 + $0x180] sm:$0xff]
        %v2716 = vld [vmem:[%s5 + $0x188] sm:$0xff]
        %v2717 = vld [vmem:[%s5 + $0x190] sm:$0xff]
        %v2718 = vld [vmem:[%s5 + $0x198] sm:$0xff]
        %v2719 = vld [vmem:[%s5 + $0x1a0] sm:$0xff]
        %v2720 = vld [vmem:[%s5 + $0x1a8] sm:$0xff]
        %v2721 = vld [vmem:[%s5 + $0x1b0] sm:$0xff]
        %v2722 = vld [vmem:[%s5 + $0x1b8] sm:$0xff]
        %v2723 = vld [vmem:[%s5 + $0x1c0] sm:$0xff]
        %v2724 = vld [vmem:[%s5 + $0x1c8] sm:$0xff]
        %v2725 = vld [vmem:[%s5 + $0x1d0] sm:$0xff]
        %v2726 = vld [vmem:[%s5 + $0x1d8] sm:$0xff]
        %v2727 = vld [vmem:[%s5 + $0x1e0] sm:$0xff]
        %v2728 = vld [vmem:[%s5 + $0x1e8] sm:$0xff]
        %v2729 = vld [vmem:[%s5 + $0x1f0] sm:$0xff]
        %v2730 = vld [vmem:[%s5 + $0x1f8] sm:$0xff]
        %v2731 = vld [vmem:[%s6] sm:$0x1]
        %2732 = vmatprep.subr.mxu0 0.0
        %2733 = vmatpush1.msra.mxu0 %v2667
        %2734 = vmatprep.subr.mxu0 0.0
        %2735 = vmatpush1.msra.mxu0 %v2668
        %2736 = vmatprep.subr.mxu0 0.0
        %2737 = vmatpush1.msra.mxu0 %v2669
        %2738 = vmatprep.subr.mxu0 0.0
        %2739 = vmatpush1.msra.mxu0 %v2670
        %2740 = vmatprep.subr.mxu0 0.0
        %2741 = vmatpush1.msra.mxu0 %v2671
        %2742 = vmatprep.subr.mxu0 0.0
        %2743 = vmatpush1.msra.mxu0 %v2672
        %2744 = vmatprep.subr.mxu0 0.0
        %2745 = vmatpush1.msra.mxu0 %v2673
        %2746 = vmatprep.subr.mxu0 0.0
        %2747 = vmatpush1.msra.mxu0 %v2674
        %2748 = vmatprep.subr.mxu0 0.0
        %2749 = vmatpush1.msra.mxu0 %v2675
        %2750 = vmatprep.subr.mxu0 0.0
        %2751 = vmatpush1.msra.mxu0 %v2676
        %2752 = vmatprep.subr.mxu0 0.0
        %2753 = vmatpush1.msra.mxu0 %v2677
        %2754 = vmatprep.subr.mxu0 0.0
        %2755 = vmatpush1.msra.mxu0 %v2678
        %2756 = vmatprep.subr.mxu0 0.0
        %2757 = vmatpush1.msra.mxu0 %v2679
        %2758 = vmatprep.subr.mxu0 0.0
        %2759 = vmatpush1.msra.mxu0 %v2680
        %2760 = vmatprep.subr.mxu0 0.0
        %2761 = vmatpush1.msra.mxu0 %v2681
        %2762 = vmatprep.subr.mxu0 0.0
        %2763 = vmatpush1.msra.mxu0 %v2682
        %2764 = vmatprep.subr.mxu0 0.0
        %2765 = vmatpush1.msra.mxu0 %v2683
        %2766 = vmatprep.subr.mxu0 0.0
        %2767 = vmatpush1.msra.mxu0 %v2684
        %2768 = vmatprep.subr.mxu0 0.0
        %2769 = vmatpush1.msra.mxu0 %v2685
        %2770 = vmatprep.subr.mxu0 0.0
        %2771 = vmatpush1.msra.mxu0 %v2686
        %2772 = vmatprep.subr.mxu0 0.0
        %2773 = vmatpush1.msra.mxu0 %v2687
        %2774 = vmatprep.subr.mxu0 0.0
        %2775 = vmatpush1.msra.mxu0 %v2688
        %2776 = vmatprep.subr.mxu0 0.0
        %2777 = vmatpush1.msra.mxu0 %v2689
        %2778 = vmatprep.subr.mxu0 0.0
        %2779 = vmatpush1.msra.mxu0 %v2690
        %2780 = vmatprep.subr.mxu0 0.0
        %2781 = vmatpush1.msra.mxu0 %v2691
        %2782 = vmatprep.subr.mxu0 0.0
        %2783 = vmatpush1.msra.mxu0 %v2692
        %2784 = vmatprep.subr.mxu0 0.0
        %2785 = vmatpush1.msra.mxu0 %v2693
        %2786 = vmatprep.subr.mxu0 0.0
        %2787 = vmatpush1.msra.mxu0 %v2694
        %2788 = vmatprep.subr.mxu0 0.0
        %2789 = vmatpush1.msra.mxu0 %v2695
        %2790 = vmatprep.subr.mxu0 0.0
        %2791 = vmatpush1.msra.mxu0 %v2696
        %2792 = vmatprep.subr.mxu0 0.0
        %2793 = vmatpush1.msra.mxu0 %v2697
        %2794 = vmatprep.subr.mxu0 0.0
        %2795 = vmatpush1.msra.mxu0 %v2698
        %2796 = vmatprep.mubr.f32.mxu0 %v2652
        %2797 = vmatmul.mubr.f32.gmra.mrb[0].mxu0 %v2645
        %v2798 = vpop.f32.mrb[0].mxu0
        %v2799 = vadd.f32 %v2731, %v2798
        %v2800 = vpop.f32.mrb[0].mxu0
        %2801 = vdwg.mxu0
        %2802 = vmatprep.subr.mxu0 0.0
        %2803 = vmatpush1.msra.mxu0 %v2699
        %2804 = vmatprep.subr.mxu0 0.0
        %2805 = vmatpush1.msra.mxu0 %v2700
        %2806 = vmatprep.subr.mxu0 0.0
        %2807 = vmatpush1.msra.mxu0 %v2701
        %2808 = vmatprep.subr.mxu0 0.0
        %2809 = vmatpush1.msra.mxu0 %v2702
        %2810 = vmatprep.subr.mxu0 0.0
        %2811 = vmatpush1.msra.mxu0 %v2703
        %2812 = vmatprep.subr.mxu0 0.0
        %2813 = vmatpush1.msra.mxu0 %v2704
        %2814 = vmatprep.subr.mxu0 0.0
        %2815 = vmatpush1.msra.mxu0 %v2705
        %2816 = vmatprep.subr.mxu0 0.0
        %2817 = vmatpush1.msra.mxu0 %v2706
        %2818 = vmatprep.subr.mxu0 0.0
        %2819 = vmatpush1.msra.mxu0 %v2707
        %2820 = vmatprep.subr.mxu0 0.0
        %2821 = vmatpush1.msra.mxu0 %v2708
        %2822 = vmatprep.subr.mxu0 0.0
        %2823 = vmatpush1.msra.mxu0 %v2709
        %2824 = vmatprep.subr.mxu0 0.0
        %2825 = vmatpush1.msra.mxu0 %v2710
        %2826 = vmatprep.subr.mxu0 0.0
        %2827 = vmatpush1.msra.mxu0 %v2711
        %2828 = vmatprep.subr.mxu0 0.0
        %2829 = vmatpush1.msra.mxu0 %v2712
        %2830 = vmatprep.subr.mxu0 0.0
        %2831 = vmatpush1.msra.mxu0 %v2713
        %2832 = vmatprep.subr.mxu0 0.0
        %2833 = vmatpush1.msra.mxu0 %v2714
        %2834 = vmatprep.subr.mxu0 0.0
        %2835 = vmatpush1.msra.mxu0 %v2715
        %2836 = vmatprep.subr.mxu0 0.0
        %2837 = vmatpush1.msra.mxu0 %v2716
        %2838 = vmatprep.subr.mxu0 0.0
        %2839 = vmatpush1.msra.mxu0 %v2717
        %2840 = vmatprep.subr.mxu0 0.0
        %2841 = vmatpush1.msra.mxu0 %v2718
        %2842 = vmatprep.subr.mxu0 0.0
        %2843 = vmatpush1.msra.mxu0 %v2719
        %2844 = vmatprep.subr.mxu0 0.0
        %2845 = vmatpush1.msra.mxu0 %v2720
        %2846 = vmatprep.subr.mxu0 0.0
        %2847 = vmatpush1.msra.mxu0 %v2721
        %2848 = vmatprep.subr.mxu0 0.0
        %2849 = vmatpush1.msra.mxu0 %v2722
        %2850 = vmatprep.subr.mxu0 0.0
        %2851 = vmatpush1.msra.mxu0 %v2723
        %2852 = vmatprep.subr.mxu0 0.0
        %2853 = vmatpush1.msra.mxu0 %v2724
        %2854 = vmatprep.subr.mxu0 0.0
        %2855 = vmatpush1.msra.mxu0 %v2725
        %2856 = vmatprep.subr.mxu0 0.0
        %2857 = vmatpush1.msra.mxu0 %v2726
        %2858 = vmatprep.subr.mxu0 0.0
        %2859 = vmatpush1.msra.mxu0 %v2727
        %2860 = vmatprep.subr.mxu0 0.0
        %2861 = vmatpush1.msra.mxu0 %v2728
        %2862 = vmatprep.subr.mxu0 0.0
        %2863 = vmatpush1.msra.mxu0 %v2729
        %2864 = vmatprep.subr.mxu0 0.0
        %2865 = vmatpush1.msra.mxu0 %v2730
        %2866 = vmatprep.mubr.f32.mxu0 %v2666
        %2867 = vmatmul.mubr.f32.gmra.mrb[0].mxu0 %v2659
        %v2868 = vpop.f32.mrb[0].mxu0
        %v2869 = vadd.f32 %v2799, %v2868
        %v2870 = vpop.f32.mrb[0].mxu0
        %2871 = vdwg.mxu0
        %vm2872 = vcmask 73728
        %2873 = vst.msk [vmem:[%s285] sm:$0x1] %vm2872, %v2869
        %s2874 = sand.u32 %s182, 1
        %s2875 = scalar_lea.sflag [#allocation5], %s2874
        %s2876 = sand.u32 %s182, 1
        %s2877 = scalar_lea.vmem [#allocation6], %s2876
        // Predicated region
        $region53: #{smaller_forward_pallas.1} parent=47 // pred_check
          %p2878 = pneg %p192
        $region54: #{smaller_forward_pallas.1} parent=47 // pred_check_branch
          %2880 = sbr.rel (%p2878) target = $region56
        $region55: #{smaller_forward_pallas.1} parent=47 // pred_region
          %s2882 = ssub.s32 16, 16
          %2883 = vsyncadd %s2875, %s2882
          %s2884 = smul.addr %s22, 16
          %s2885 = scalar_lea.hbm %s7, %s2884
          %s2887 = sshll.u32 %s2877, 4
          %s2888 = int_to_ptr.vmem [resolvable:$true] %s2887
          %2890 = dma.vmem_to_hbm [thread:$0]  %s2888, 16, %s2885, %s2875
        $region56: #{smaller_forward_pallas.1} parent=47 // pred_fallthru
          _
      $region48: #{smaller_forward_pallas.1} parent=5 // pred_fallthru
        _
      %p2891 = scmp.le.s32.totalorder 2, %s17
      // Predicated region
      $region57: #{smaller_forward_pallas.1} parent=5 // pred_check
        %p2892 = pneg %p2891
      $region58: #{smaller_forward_pallas.1} parent=5 // pred_check_branch
        %2894 = sbr.rel (%p2892) target = $region60
      $region59: #{smaller_forward_pallas.1} parent=5 // pred_region
        %s2895 = ssub.s32 %s17, 2
        // Predicated region
        $region61: #{smaller_forward_pallas.1} parent=59 // pred_check
          %p2896 = pneg %p198
        $region62: #{smaller_forward_pallas.1} parent=59 // pred_check_branch
          %2898 = sbr.rel (%p2896) target = $region64
        $region63: #{smaller_forward_pallas.1} parent=59 // pred_region
          %s2899 = sand.u32 %s183, 1
          %s2900 = scalar_lea.sflag [#allocation5], %s2899
          %s2901 = sand.u32 %s183, 1
          %s2902 = scalar_lea.vmem [#allocation6], %s2901
          %2903 = dma.done %s2900, 16
        $region64: #{smaller_forward_pallas.1} parent=59 // pred_fallthru
          _
      $region60: #{smaller_forward_pallas.1} parent=5 // pred_fallthru
        _
    $region6: #{smaller_forward_pallas.1} parent=1 // loop_footer
      %s21 = sadd.s32 1, %s17
    $region7: #{smaller_forward_pallas.1} parent=1 // loop_footer_branch
      %16 = sbr.rel target = $region3
    $region8: #{smaller_forward_pallas.1} parent=1 // loop_exit
      _
    %2904 = vsyncpa [#allocation4], 1
    %s2905 = scalar_lea.sflag [#allocation4], 1
    %2906 = vsyncpa %s2905, 1
    %2907 = vsyncpa [#allocation5], 1
    %s2908 = scalar_lea.sflag [#allocation5], 1
    %2909 = vsyncpa %s2908, 1

</llo_original>
